<compile_context>
chip_gen: v7x
topology: tpu7x:2x2x1
jax: 0.10.0
libtpu: 0.0.40
codegen_flags: <defaults>
</compile_context>

<pallas_src>
import functools

import jax
import jax.numpy as jnp
from jax.experimental import pallas as pl
from jax.experimental.pallas import tpu as pltpu

LANE = 128
SUBLANE = 8


def _cnn_kernel(x_ref, w_ref, b_ref, o_ref):
    """Fused im2col-Conv1d + global max-pool + bias + ReLU for one batch tile.

    x_ref: (TB * L_out, K * C_in)   bf16 im2col activation rows
    w_ref: (K * C_in, C_out_pad)    bf16 folded conv weights (C_out padded to 128 lanes)
    b_ref: (1, C_out_pad)           f32 bias (padded)
    o_ref: (TB, C_out_pad)          bf16 lane-dense output tile
    """
    TB, C_out_pad = o_ref.shape
    M = x_ref.shape[0]
    L_out = M // TB

    # Single MXU push per grid step: M = TB*L_out rows, contraction depth K*C_in.
    y = jnp.dot(x_ref[...], w_ref[...], preferred_element_type=jnp.float32)

    # Global max-pool over conv positions (groups of L_out consecutive rows), then
    # bias + ReLU hoisted AFTER the max (exact: bias constant over L, ReLU monotone).
    # Epilogue math stays f32 (v5e has no bf16 VALU); cast bf16 only at the store.
    m = jnp.max(y.reshape(TB, L_out, C_out_pad), axis=1)          # (TB, C_out_pad)
    o_ref[...] = jnp.maximum(m + b_ref[...], 0.0).astype(o_ref.dtype)


def precompute_conv_params(weight_ock, bias_o):
    """Parameter prep (run once, not per forward): fold conv taps, pad to 128 lanes.

    weight_ock: (C_out, C_in, K) like nn.Conv1d.weight; bias_o: (C_out,).
    Returns (w_pad: (K*C_in, C_out_pad) bf16, b_pad: (1, C_out_pad) f32).
    """
    C_out, C_in, K = weight_ock.shape
    C_out_pad = ((C_out + LANE - 1) // LANE) * LANE
    # w_col[k*C_in + c, o] = weight[o, c, k]  -- matches the im2col row layout below.
    w_col = jnp.transpose(weight_ock, (2, 1, 0)).reshape(K * C_in, C_out)
    w_pad = jnp.zeros((K * C_in, C_out_pad), jnp.bfloat16)
    w_pad = w_pad.at[:, :C_out].set(w_col.astype(jnp.bfloat16))
    b_pad = jnp.zeros((1, C_out_pad), jnp.float32)
    b_pad = b_pad.at[:, :C_out].set(bias_o.astype(jnp.float32))
    return w_pad, b_pad


@functools.partial(jax.jit, static_argnames=("c_out", "block_b"))
def cnn_forward(x_ncl, w_pad, b_pad, *, c_out, block_b=128):
    """x_ncl: (B, C_in, L) like PyTorch. Returns (B, c_out) bf16."""
    B, C_in, L = x_ncl.shape
    KC, C_out_pad = w_pad.shape
    K = KC // C_in
    L_out = L - K + 1
    if L_out <= 0:
        raise ValueError(f"max_word_length={L} must exceed kernel_size-1={K - 1}")

    # Batch tile: multiple of 8 sublanes; pad B up to a multiple of TB (no
    # single-tile fallback), so the grid keeps >=1 pipelined, megacore-shardable steps.
    TB = min(block_b, ((B + SUBLANE - 1) // SUBLANE) * SUBLANE)
    TB = max(SUBLANE, ((TB + SUBLANE - 1) // SUBLANE) * SUBLANE)
    n_blocks = pl.cdiv(B, TB)
    B_pad = n_blocks * TB

    # One fused XLA pass: NCL->NLC transpose + im2col window stack + bf16 cast +
    # batch pad.  x_col[b, t, k, c] = x[b, c, t+k].
    # TODO(synk): produce the activation channels-last / pre-im2col'd upstream (fused
    # into the char-embedding gather) to drop this HBM pass entirely.
    x_blc = jnp.transpose(x_ncl, (0, 2, 1))                                   # (B, L, C_in)
    x_col = jnp.stack([x_blc[:, k:k + L_out, :] for k in range(K)], axis=2)   # (B, L_out, K, C_in)
    x_col = x_col.reshape(B, L_out * KC).astype(jnp.bfloat16)
    if B_pad != B:
        x_col = jnp.pad(x_col, ((0, B_pad - B), (0, 0)))
    x_col = x_col.reshape(B_pad * L_out, KC)

    out = pl.pallas_call(
        _cnn_kernel,
        out_shape=jax.ShapeDtypeStruct((B_pad, C_out_pad), jnp.bfloat16),
        grid_spec=pltpu.PrefetchScalarGridSpec(
            num_scalar_prefetch=0,
            grid=(n_blocks,),
            in_specs=[
                pl.BlockSpec((TB * L_out, KC), lambda i: (i, 0)),
                pl.BlockSpec((KC, C_out_pad), lambda i: (0, 0)),
                pl.BlockSpec((1, C_out_pad), lambda i: (0, 0)),
            ],
            out_specs=pl.BlockSpec((TB, C_out_pad), lambda i: (i, 0)),
        ),
        compiler_params=pltpu.CompilerParams(
            dimension_semantics=("parallel",),
            vmem_limit_bytes=32 * 1024 * 1024,  # safe on v7x's 64 MiB per-TC VMEM
        ),
    )(x_col, w_pad, b_pad)

    # De-pad (pad batch rows + pad lanes are discarded).
    # TODO(synk): let the consumer read the padded (B_pad, 128) bf16 layout directly
    # to avoid this extra slice pass.
    return out[:B, :c_out]


def cnn_reference(x_ncl, weight_ock, bias_o):
    """Pure-JAX f32 reference mirroring nn.Conv1d + ReLU + MaxPool1d + squeeze."""
    B, C_in, L = x_ncl.shape
    C_out, _, K = weight_ock.shape
    L_out = L - K + 1
    conv = jnp.zeros((B, C_out, L_out), jnp.float32)
    for k in range(K):
        # out[b,o,t] += sum_c w[o,c,k] * x[b,c,t+k]
        conv += jnp.einsum("oc,bct->bot", weight_ock[:, :, k], x_ncl[:, :, k:k + L_out])
    conv += bias_o[None, :, None]
    conv = jnp.maximum(conv, 0.0)
    return jnp.max(conv, axis=2)  # (B, C_out)


if __name__ == "__main__":
    # Shapes consistent with the module's forward.  batch=500 is deliberately not a
    # multiple of the 128-row batch tile: it exercises the padded grid
    # (B_pad=512 -> 4 pipelined "parallel" grid steps).
    batch = 500
    emb_char_size = 8       # in_channels
    emb_word_size = 16      # out_channels
    max_word_length = 12
    kernel_size = 5

    key = jax.random.PRNGKey(0)
    kx, kw, kb = jax.random.split(key, 3)

    x = jax.random.normal(kx, (batch, emb_char_size, max_word_length), jnp.float32)
    bound = 1.0 / jnp.sqrt(emb_char_size * kernel_size)
    weight = jax.random.uniform(kw, (emb_word_size, emb_char_size, kernel_size),
                                jnp.float32, -bound, bound)
    bias = jax.random.uniform(kb, (emb_word_size,), jnp.float32, -bound, bound)

    # Parameter prep once; forward per call.
    w_pad, b_pad = precompute_conv_params(weight, bias)
    out = jax.block_until_ready(cnn_forward(x, w_pad, b_pad, c_out=emb_word_size))
    assert out.shape == (batch, emb_word_size), out.shape
    out_f32 = out.astype(jnp.float32)

    # Tight check: reference evaluated on the same bf16-rounded inputs the kernel
    # consumes (f32 accumulation in both); tolerance covers the final bf16 store.
    x_q = x.astype(jnp.bfloat16).astype(jnp.float32)
    w_q = weight.astype(jnp.bfloat16).astype(jnp.float32)
    ref_q = cnn_reference(x_q, w_q, bias)
    err_q = jnp.max(jnp.abs(out_f32 - ref_q))
    assert jnp.allclose(out_f32, ref_q, atol=2e-2, rtol=2e-2), err_q

    # Loose sanity check against the full-f32 reference (bf16 quantization noise).
    ref_f32 = cnn_reference(x, weight, bias)
    err_f = jnp.max(jnp.abs(out_f32 - ref_f32))
    assert jnp.allclose(out_f32, ref_f32, atol=1e-1, rtol=1e-1), err_f

    print("KERNEL_OK")
</pallas_src>

<mosaic_0001>
module attributes {stable_mosaic.version = 11 : i64} {
  func.func @_cnn_kernel(%arg0: i32, %arg1: memref<1024x40xbf16, #tpu.memory_space<vmem>>, %arg2: memref<40x128xbf16, #tpu.memory_space<vmem>>, %arg3: memref<1x128xf32, #tpu.memory_space<vmem>>, %arg4: memref<128x128xbf16, #tpu.memory_space<vmem>>) attributes {dimension_semantics = [#tpu.dimension_semantics<parallel>], iteration_bounds = array<i64: 4>, scalar_prefetch = 0 : i64, scratch_operands = 0 : i64, tpu.core_type = #tpu.core_type<tc>, window_params = [{transform_indices = @transform_0, window_bounds = array<i64: 1024, 40>}, {pipeline_mode = #tpu.pipeline_mode<synchronous>, transform_indices = @transform_1, window_bounds = array<i64: 40, 128>}, {pipeline_mode = #tpu.pipeline_mode<synchronous>, transform_indices = @transform_2, window_bounds = array<i64: 1, 128>}, {transform_indices = @transform_3, window_bounds = array<i64: 128, 128>}]} {
    %c0 = arith.constant 0 : index
    %c0_0 = arith.constant 0 : index
    %0 = vector.load %arg1[%c0, %c0_0] : memref<1024x40xbf16, #tpu.memory_space<vmem>>, vector<1024x40xbf16>
    %c0_1 = arith.constant 0 : index
    %c0_2 = arith.constant 0 : index
    %1 = vector.load %arg2[%c0_1, %c0_2] : memref<40x128xbf16, #tpu.memory_space<vmem>>, vector<40x128xbf16>
    %cst = arith.constant dense<0.000000e+00> : vector<1024x128xf32>
    %2 = tpu.matmul %0, %1, %cst {dimension_numbers = #tpu.dot_dimension_numbers<[1], [0], [0], [1], [0, 0, 1, 1], [], []>} : vector<1024x40xbf16>, vector<40x128xbf16>, vector<1024x128xf32> -> vector<1024x128xf32>
    %3 = vector.shape_cast %2 : vector<1024x128xf32> to vector<128x8x128xf32>
    %cst_3 = arith.constant dense<0xFF800000> : vector<128x128xf32>
    %4 = vector.multi_reduction <maximumf>, %3, %cst_3 [1] : vector<128x8x128xf32> to vector<128x128xf32>
    %c0_4 = arith.constant 0 : index
    %c0_5 = arith.constant 0 : index
    %5 = vector.load %arg3[%c0_4, %c0_5] : memref<1x128xf32, #tpu.memory_space<vmem>>, vector<1x128xf32>
    %6 = vector.broadcast %5 : vector<1x128xf32> to vector<128x128xf32>
    %7 = arith.addf %4, %6 : vector<128x128xf32>
    %cst_6 = arith.constant 0.000000e+00 : f32
    %8 = vector.broadcast %cst_6 : f32 to vector<128x128xf32>
    %9 = arith.maximumf %7, %8 : vector<128x128xf32>
    %10 = arith.truncf %9 : vector<128x128xf32> to vector<128x128xbf16>
    %c0_7 = arith.constant 0 : index
    %c0_8 = arith.constant 0 : index
    %11 = vector.load %arg4[%c0_7, %c0_8] : memref<128x128xbf16, #tpu.memory_space<vmem>>, vector<128x128xbf16>
    tpu.vector_store %arg4[%c0_7, %c0_8], %10 {strides = array<i32>} : memref<128x128xbf16, #tpu.memory_space<vmem>>, vector<128x128xbf16>,
    return
  }
  func.func @transform_0(%arg0: i32) -> (i32, i32) {
    %c0_i32 = arith.constant 0 : i32
    %c0_i32_0 = arith.constant 0 : i32
    return %arg0, %c0_i32 : i32, i32
  }
  func.func @transform_1(%arg0: i32) -> (i32, i32) {
    %c0_i32 = arith.constant 0 : i32
    %c0_i32_0 = arith.constant 0 : i32
    %c0_i32_1 = arith.constant 0 : i32
    return %c0_i32, %c0_i32_0 : i32, i32
  }
  func.func @transform_2(%arg0: i32) -> (i32, i32) {
    %c0_i32 = arith.constant 0 : i32
    %c0_i32_0 = arith.constant 0 : i32
    %c0_i32_1 = arith.constant 0 : i32
    return %c0_i32, %c0_i32_0 : i32, i32
  }
  func.func @transform_3(%arg0: i32) -> (i32, i32) {
    %c0_i32 = arith.constant 0 : i32
    %c0_i32_0 = arith.constant 0 : i32
    return %arg0, %c0_i32 : i32, i32
  }
}

</mosaic_0001>

<llo_original>
// kernel: cnn_forward.1
$region0: #{cnn_forward.1}
  #allocation0 [shape = 'u32[]', space=smem, size = 0x4, offset = 0x4, fixed_abs, tag = 'smem constant byte address 0x4 - core index']
  #allocation1 [shape = 'u32[144,128]{1,0:T(1,128)}', space=vmem, size = 0x12000, scoped, tag = 'internal scratch']
  %s0 = inlined_call_operand.vmem [shape: bf16[4096,40], index: 0, kind: input, shape index: {}]
  %s1 = inlined_call_operand.vmem [shape: bf16[40,128], index: 1, kind: input, shape index: {}]
  %s2 = inlined_call_operand.vmem [shape: f32[1,128], index: 2, kind: input, shape index: {}]
  %s3 = inlined_call_operand.vmem [shape: bf16[512,128], index: 3, kind: output, shape index: {}]
  %s4 = sld [smem:[#allocation0]]
  $region45: #{cnn_forward.1} parent=0
    _
  %s6 = ssub.s32 1, %s4
  %s7 = scalar_select 0, %s6, %s4
  loop: start=0, step=1, limit=6
  $region2: #{cnn_forward.1} parent=0 // loop_pre_header
    _
  $region3: #{cnn_forward.1} parent=0 // loop_header
    %s9 = sphi 0, %s13
    %p10 = scmp.ge.s32.totalorder %s9, 6
    %s19 = sphi 0, %s21
    %s22 = sphi 0, %s19
    %s23 = sphi 0, %s22
    %s39 = sphi 0, %s23
    %s43 = sphi 0, %s43
    %s45 = sphi 0, %s43
    %s46 = sphi 0, %s45
    %s60 = sphi 0, %s46
    %s64 = sphi 0, %s64
    %s66 = sphi 0, %s64
    %s67 = sphi 0, %s66
    %s81 = sphi 0, %s67
    %s87 = sphi 0, %s89
    %s90 = sphi 0, %s87
    %s91 = sphi 0, %s90
    %s107 = sphi 0, %s91
  $region4: #{cnn_forward.1} parent=0 // loop_header_branch
    %12 = sbr.rel (%p10) target = $region8
  $region5: #{cnn_forward.1} parent=0 // loop_body
    %s14 = ssub.s32 %s9, 1
    %s15 = ssub.s32 %s9, 2
    %s16 = sadd.s32 %s9, 1
    %s17 = ssub.s32 %s9, %s16
    %p18 = scmp.eq.s32.totalorder %s17, 0
    %s20 = sadd.s32 %s19, 1
    %s21 = scalar_select %p18, %s19, %s20
    %p24 = pneg %p18
    %p25 = scmp.eq.s32.totalorder %s9, 3
    %p26 = por %p24, %p25
    %p27 = scmp.ne.s32.totalorder %s19, %s22
    %p28 = scmp.eq.s32.totalorder %s9, 0
    %p29 = por %p27, %p28
    %p30 = scmp.ne.s32.totalorder %s19, %s22
    %p31 = scmp.eq.s32.totalorder %s14, 3
    %p32 = por %p30, %p31
    %p33 = scmp.ne.s32.totalorder %s22, %s23
    %p34 = scmp.eq.s32.totalorder %s14, 0
    %p35 = por %p33, %p34
    %p36 = scmp.ne.s32.totalorder %s22, %s23
    %p37 = scmp.eq.s32.totalorder %s15, 3
    %p38 = por %p36, %p37
    %p40 = scmp.ne.s32.totalorder %s23, %s39
    %p41 = scmp.eq.s32.totalorder %s15, 0
    %p42 = por %p40, %p41
    %s44 = sadd.s32 %s43, 1
    %p47 = scmp.eq.s32.totalorder %s9, 3
    %p48 = scmp.ne.s32.totalorder %s43, %s45
    %p49 = scmp.eq.s32.totalorder %s9, 0
    %p50 = por %p48, %p49
    %p51 = scmp.ne.s32.totalorder %s43, %s45
    %p52 = scmp.eq.s32.totalorder %s14, 3
    %p53 = por %p51, %p52
    %p54 = scmp.ne.s32.totalorder %s45, %s46
    %p55 = scmp.eq.s32.totalorder %s14, 0
    %p56 = por %p54, %p55
    %p57 = scmp.ne.s32.totalorder %s45, %s46
    %p58 = scmp.eq.s32.totalorder %s15, 3
    %p59 = por %p57, %p58
    %p61 = scmp.ne.s32.totalorder %s46, %s60
    %p62 = scmp.eq.s32.totalorder %s15, 0
    %p63 = por %p61, %p62
    %s65 = sadd.s32 %s64, 1
    %p68 = scmp.eq.s32.totalorder %s9, 3
    %p69 = scmp.ne.s32.totalorder %s64, %s66
    %p70 = scmp.eq.s32.totalorder %s9, 0
    %p71 = por %p69, %p70
    %p72 = scmp.ne.s32.totalorder %s64, %s66
    %p73 = scmp.eq.s32.totalorder %s14, 3
    %p74 = por %p72, %p73
    %p75 = scmp.ne.s32.totalorder %s66, %s67
    %p76 = scmp.eq.s32.totalorder %s14, 0
    %p77 = por %p75, %p76
    %p78 = scmp.ne.s32.totalorder %s66, %s67
    %p79 = scmp.eq.s32.totalorder %s15, 3
    %p80 = por %p78, %p79
    %p82 = scmp.ne.s32.totalorder %s67, %s81
    %p83 = scmp.eq.s32.totalorder %s15, 0
    %p84 = por %p82, %p83
    %s85 = ssub.s32 %s9, %s16
    %p86 = scmp.eq.s32.totalorder %s85, 0
    %s88 = sadd.s32 %s87, 1
    %s89 = scalar_select %p86, %s87, %s88
    %p92 = pneg %p86
    %p93 = scmp.eq.s32.totalorder %s9, 3
    %p94 = por %p92, %p93
    %p95 = scmp.ne.s32.totalorder %s87, %s90
    %p96 = scmp.eq.s32.totalorder %s9, 0
    %p97 = por %p95, %p96
    %p98 = scmp.ne.s32.totalorder %s87, %s90
    %p99 = scmp.eq.s32.totalorder %s14, 3
    %p100 = por %p98, %p99
    %p101 = scmp.ne.s32.totalorder %s90, %s91
    %p102 = scmp.eq.s32.totalorder %s14, 0
    %p103 = por %p101, %p102
    %p104 = scmp.ne.s32.totalorder %s90, %s91
    %p105 = scmp.eq.s32.totalorder %s15, 3
    %p106 = por %p104, %p105
    %p108 = scmp.ne.s32.totalorder %s91, %s107
    %p109 = scmp.eq.s32.totalorder %s15, 0
    %p110 = por %p108, %p109
    %p111 = scmp.le.s32.totalorder 1, %s9
    %p112 = scmp.lt.s32.totalorder %s9, 5
    %p113 = pnand %p111, %p112
    %p114 = pneg %p113
    // Predicated region
    $region9: #{cnn_forward.1} parent=5 // pred_check
      _
    $region10: #{cnn_forward.1} parent=5 // pred_check_branch
      %116 = sbr.rel (%p113) target = $region12
    $region11: #{cnn_forward.1} parent=5 // pred_region
      %s117 = ssub.s32 %s9, 1
      // Predicated region
      $region13: #{cnn_forward.1} parent=11 // pred_check
        %p118 = pneg %p56
      $region14: #{cnn_forward.1} parent=11 // pred_check_branch
        %120 = sbr.rel (%p118) target = $region16
      $region15: #{cnn_forward.1} parent=11 // pred_region
        _
      $region16: #{cnn_forward.1} parent=11 // pred_fallthru
        _
      // Predicated region
      $region17: #{cnn_forward.1} parent=11 // pred_check
        %p121 = pneg %p77
      $region18: #{cnn_forward.1} parent=11 // pred_check_branch
        %123 = sbr.rel (%p121) target = $region20
      $region19: #{cnn_forward.1} parent=11 // pred_region
        _
      $region20: #{cnn_forward.1} parent=11 // pred_fallthru
        _
    $region12: #{cnn_forward.1} parent=5 // pred_fallthru
      _
    %p124 = scmp.lt.s32.totalorder %s9, 4
    // Predicated region
    $region21: #{cnn_forward.1} parent=5 // pred_check
      %p125 = pneg %p124
    $region22: #{cnn_forward.1} parent=5 // pred_check_branch
      %127 = sbr.rel (%p125) target = $region24
    $region23: #{cnn_forward.1} parent=5 // pred_region
      // Predicated region
      $region25: #{cnn_forward.1} parent=23 // pred_check
        %p128 = pneg %p29
      $region26: #{cnn_forward.1} parent=23 // pred_check_branch
        %130 = sbr.rel (%p128) target = $region28
      $region27: #{cnn_forward.1} parent=23 // pred_region
        %s131 = smul.u32 128, %s9
        %p132 = scmp.lt.s32.totalorder %s131, 511
        %s133 = scalar_select %p132, %s131, 511
        %s134 = smul.addr %s133, 4
        %s135 = scalar_lea.vmem %s0, %s134
        %s136 = smul.u32 128, %s9
      $region28: #{cnn_forward.1} parent=23 // pred_fallthru
        _
    $region24: #{cnn_forward.1} parent=5 // pred_fallthru
      _
    %p137 = scmp.le.s32.totalorder 1, %s9
    %p138 = scmp.lt.s32.totalorder %s9, 5
    %p139 = pnand %p137, %p138
    %p140 = pneg %p139
    // Predicated region
    $region29: #{cnn_forward.1} parent=5 // pred_check
      _
    $region30: #{cnn_forward.1} parent=5 // pred_check_branch
      %142 = sbr.rel (%p139) target = $region32
    $region31: #{cnn_forward.1} parent=5 // pred_region
      %s143 = ssub.s32 %s9, 1
      %s144 = smul.u32 128, %s14
      %p145 = scmp.lt.s32.totalorder %s144, 511
      %s146 = scalar_select %p145, %s144, 511
      %s147 = smul.addr %s146, 4
      %s148 = scalar_lea.vmem %s0, %s147
      %p149 = pneg %p35
      %p150 = pneg %p32
      %p151 = pneg %p56
      %p152 = pneg %p53
      %p153 = pneg %p77
      %p154 = pneg %p74
      %p155 = pneg %p103
      %p156 = pneg %p100
      %s157 = smul.u32 16, %s14
      %p158 = scmp.lt.s32.totalorder %s157, 63
      %s159 = scalar_select %p158, %s157, 63
      %s160 = smul.addr %s159, 4
      %s161 = scalar_lea.vmem %s3, %s160
      %s162 = smul.u32 128, %s14
      %p163 = scmp.lt.s32.totalorder %s162, 511
      %s164 = scalar_select %p163, %s162, 511
      %s165 = smul.addr %s164, 4
      %s166 = scalar_lea.vmem %s0, %s165
      %s167 = smul.u32 128, %s14
      %s168 = smul.u32 16, %s14
      %p169 = scmp.lt.s32.totalorder %s168, 63
      %s170 = scalar_select %p169, %s168, 63
      %s171 = smul.addr %s170, 4
      %s172 = scalar_lea.vmem %s3, %s171
      %s173 = smul.u32 16, %s14
      %v175 = vld [vmem:[%s166] sm:$0xf]
      %v176 = vld [vmem:[%s166 + $0x4] sm:$0xf]
      %v177 = vld [vmem:[%s166 + $0x8] sm:$0xf]
      %v178 = vld [vmem:[%s166 + $0xc] sm:$0xf]
      %v179 = vld [vmem:[%s166 + $0x10] sm:$0xf]
      %v180 = vld [vmem:[%s166 + $0x14] sm:$0xf]
      %v181 = vld [vmem:[%s166 + $0x18] sm:$0xf]
      %v182 = vld [vmem:[%s166 + $0x1c] sm:$0xf]
      %v183 = vld [vmem:[%s166 + $0x20] sm:$0xf]
      %v184 = vld [vmem:[%s166 + $0x24] sm:$0xf]
      %v185 = vld [vmem:[%s166 + $0x28] sm:$0xf]
      %v186 = vld [vmem:[%s166 + $0x2c] sm:$0xf]
      %v187 = vld [vmem:[%s166 + $0x30] sm:$0xf]
      %v188 = vld [vmem:[%s166 + $0x34] sm:$0xf]
      %v189 = vld [vmem:[%s166 + $0x38] sm:$0xf]
      %v190 = vld [vmem:[%s166 + $0x3c] sm:$0xf]
      %v191 = vld [vmem:[%s166 + $0x40] sm:$0xf]
      %v192 = vld [vmem:[%s166 + $0x44] sm:$0xf]
      %v193 = vld [vmem:[%s166 + $0x48] sm:$0xf]
      %v194 = vld [vmem:[%s166 + $0x4c] sm:$0xf]
      %v195 = vld [vmem:[%s166 + $0x50] sm:$0xf]
      %v196 = vld [vmem:[%s166 + $0x54] sm:$0xf]
      %v197 = vld [vmem:[%s166 + $0x58] sm:$0xf]
      %v198 = vld [vmem:[%s166 + $0x5c] sm:$0xf]
      %v199 = vld [vmem:[%s166 + $0x60] sm:$0xf]
      %v200 = vld [vmem:[%s166 + $0x64] sm:$0xf]
      %v201 = vld [vmem:[%s166 + $0x68] sm:$0xf]
      %v202 = vld [vmem:[%s166 + $0x6c] sm:$0xf]
      %v203 = vld [vmem:[%s166 + $0x70] sm:$0xf]
      %v204 = vld [vmem:[%s166 + $0x74] sm:$0xf]
      %v205 = vld [vmem:[%s166 + $0x78] sm:$0xf]
      %v206 = vld [vmem:[%s166 + $0x7c] sm:$0xf]
      %v207 = vld [vmem:[%s166 + $0x80] sm:$0xf]
      %v208 = vld [vmem:[%s166 + $0x84] sm:$0xf]
      %v209 = vld [vmem:[%s166 + $0x88] sm:$0xf]
      %v210 = vld [vmem:[%s166 + $0x8c] sm:$0xf]
      %v211 = vld [vmem:[%s166 + $0x90] sm:$0xf]
      %v212 = vld [vmem:[%s166 + $0x94] sm:$0xf]
      %v213 = vld [vmem:[%s166 + $0x98] sm:$0xf]
      %v214 = vld [vmem:[%s166 + $0x9c] sm:$0xf]
      %v215 = vld [vmem:[%s166 + $0xa0] sm:$0xf]
      %v216 = vld [vmem:[%s166 + $0xa4] sm:$0xf]
      %v217 = vld [vmem:[%s166 + $0xa8] sm:$0xf]
      %v218 = vld [vmem:[%s166 + $0xac] sm:$0xf]
      %v219 = vld [vmem:[%s166 + $0xb0] sm:$0xf]
      %v220 = vld [vmem:[%s166 + $0xb4] sm:$0xf]
      %v221 = vld [vmem:[%s166 + $0xb8] sm:$0xf]
      %v222 = vld [vmem:[%s166 + $0xbc] sm:$0xf]
      %v223 = vld [vmem:[%s166 + $0xc0] sm:$0xf]
      %v224 = vld [vmem:[%s166 + $0xc4] sm:$0xf]
      %v225 = vld [vmem:[%s166 + $0xc8] sm:$0xf]
      %v226 = vld [vmem:[%s166 + $0xcc] sm:$0xf]
      %v227 = vld [vmem:[%s166 + $0xd0] sm:$0xf]
      %v228 = vld [vmem:[%s166 + $0xd4] sm:$0xf]
      %v229 = vld [vmem:[%s166 + $0xd8] sm:$0xf]
      %v230 = vld [vmem:[%s166 + $0xdc] sm:$0xf]
      %v231 = vld [vmem:[%s166 + $0xe0] sm:$0xf]
      %v232 = vld [vmem:[%s166 + $0xe4] sm:$0xf]
      %v233 = vld [vmem:[%s166 + $0xe8] sm:$0xf]
      %v234 = vld [vmem:[%s166 + $0xec] sm:$0xf]
      %v235 = vld [vmem:[%s166 + $0xf0] sm:$0xf]
      %v236 = vld [vmem:[%s166 + $0xf4] sm:$0xf]
      %v237 = vld [vmem:[%s166 + $0xf8] sm:$0xf]
      %v238 = vld [vmem:[%s166 + $0xfc] sm:$0xf]
      %v239 = vld [vmem:[%s166 + $0x100] sm:$0xf]
      %v240 = vld [vmem:[%s166 + $0x104] sm:$0xf]
      %v241 = vld [vmem:[%s166 + $0x108] sm:$0xf]
      %v242 = vld [vmem:[%s166 + $0x10c] sm:$0xf]
      %v243 = vld [vmem:[%s166 + $0x110] sm:$0xf]
      %v244 = vld [vmem:[%s166 + $0x114] sm:$0xf]
      %v245 = vld [vmem:[%s166 + $0x118] sm:$0xf]
      %v246 = vld [vmem:[%s166 + $0x11c] sm:$0xf]
      %v247 = vld [vmem:[%s166 + $0x120] sm:$0xf]
      %v248 = vld [vmem:[%s166 + $0x124] sm:$0xf]
      %v249 = vld [vmem:[%s166 + $0x128] sm:$0xf]
      %v250 = vld [vmem:[%s166 + $0x12c] sm:$0xf]
      %v251 = vld [vmem:[%s166 + $0x130] sm:$0xf]
      %v252 = vld [vmem:[%s166 + $0x134] sm:$0xf]
      %v253 = vld [vmem:[%s166 + $0x138] sm:$0xf]
      %v254 = vld [vmem:[%s166 + $0x13c] sm:$0xf]
      %v255 = vld [vmem:[%s166 + $0x140] sm:$0xf]
      %v256 = vld [vmem:[%s166 + $0x144] sm:$0xf]
      %v257 = vld [vmem:[%s166 + $0x148] sm:$0xf]
      %v258 = vld [vmem:[%s166 + $0x14c] sm:$0xf]
      %v259 = vld [vmem:[%s166 + $0x150] sm:$0xf]
      %v260 = vld [vmem:[%s166 + $0x154] sm:$0xf]
      %v261 = vld [vmem:[%s166 + $0x158] sm:$0xf]
      %v262 = vld [vmem:[%s166 + $0x15c] sm:$0xf]
      %v263 = vld [vmem:[%s166 + $0x160] sm:$0xf]
      %v264 = vld [vmem:[%s166 + $0x164] sm:$0xf]
      %v265 = vld [vmem:[%s166 + $0x168] sm:$0xf]
      %v266 = vld [vmem:[%s166 + $0x16c] sm:$0xf]
      %v267 = vld [vmem:[%s166 + $0x170] sm:$0xf]
      %v268 = vld [vmem:[%s166 + $0x174] sm:$0xf]
      %v269 = vld [vmem:[%s166 + $0x178] sm:$0xf]
      %v270 = vld [vmem:[%s166 + $0x17c] sm:$0xf]
      %v271 = vld [vmem:[%s166 + $0x180] sm:$0xf]
      %v272 = vld [vmem:[%s166 + $0x184] sm:$0xf]
      %v273 = vld [vmem:[%s166 + $0x188] sm:$0xf]
      %v274 = vld [vmem:[%s166 + $0x18c] sm:$0xf]
      %v275 = vld [vmem:[%s166 + $0x190] sm:$0xf]
      %v276 = vld [vmem:[%s166 + $0x194] sm:$0xf]
      %v277 = vld [vmem:[%s166 + $0x198] sm:$0xf]
      %v278 = vld [vmem:[%s166 + $0x19c] sm:$0xf]
      %v279 = vld [vmem:[%s166 + $0x1a0] sm:$0xf]
      %v280 = vld [vmem:[%s166 + $0x1a4] sm:$0xf]
      %v281 = vld [vmem:[%s166 + $0x1a8] sm:$0xf]
      %v282 = vld [vmem:[%s166 + $0x1ac] sm:$0xf]
      %v283 = vld [vmem:[%s166 + $0x1b0] sm:$0xf]
      %v284 = vld [vmem:[%s166 + $0x1b4] sm:$0xf]
      %v285 = vld [vmem:[%s166 + $0x1b8] sm:$0xf]
      %v286 = vld [vmem:[%s166 + $0x1bc] sm:$0xf]
      %v287 = vld [vmem:[%s166 + $0x1c0] sm:$0xf]
      %v288 = vld [vmem:[%s166 + $0x1c4] sm:$0xf]
      %v289 = vld [vmem:[%s166 + $0x1c8] sm:$0xf]
      %v290 = vld [vmem:[%s166 + $0x1cc] sm:$0xf]
      %v291 = vld [vmem:[%s166 + $0x1d0] sm:$0xf]
      %v292 = vld [vmem:[%s166 + $0x1d4] sm:$0xf]
      %v293 = vld [vmem:[%s166 + $0x1d8] sm:$0xf]
      %v294 = vld [vmem:[%s166 + $0x1dc] sm:$0xf]
      %v295 = vld [vmem:[%s166 + $0x1e0] sm:$0xf]
      %v296 = vld [vmem:[%s166 + $0x1e4] sm:$0xf]
      %v297 = vld [vmem:[%s166 + $0x1e8] sm:$0xf]
      %v298 = vld [vmem:[%s166 + $0x1ec] sm:$0xf]
      %v299 = vld [vmem:[%s166 + $0x1f0] sm:$0xf]
      %v300 = vld [vmem:[%s166 + $0x1f4] sm:$0xf]
      %v301 = vld [vmem:[%s166 + $0x1f8] sm:$0xf]
      %v302 = vld [vmem:[%s166 + $0x1fc] sm:$0xf]
      %v303 = vld [vmem:[%s1] sm:$0xf]
      %v304 = vld [vmem:[%s1 + $0x4] sm:$0xf]
      %v305 = vld [vmem:[%s1 + $0x8] sm:$0xf]
      %v306 = vld [vmem:[%s1 + $0xc] sm:$0xf]
      %v307 = vld [vmem:[%s1 + $0x10] sm:$0xf]
      %v436 = vunpack.c.l.b16 %v175
      %v437 = vunpack.c.l.b16 %v176
      %v438 = vunpack.c.l.b16 %v177
      %v439 = vunpack.c.l.b16 %v178
      %v440 = vunpack.c.l.b16 %v179
      %v441 = vunpack.c.l.b16 %v180
      %v442 = vunpack.c.l.b16 %v181
      %v443 = vunpack.c.l.b16 %v182
      %v444 = vunpack.c.l.b16 %v183
      %v445 = vunpack.c.l.b16 %v184
      %v446 = vunpack.c.l.b16 %v185
      %v447 = vunpack.c.l.b16 %v186
      %v448 = vunpack.c.l.b16 %v187
      %v449 = vunpack.c.l.b16 %v188
      %v450 = vunpack.c.l.b16 %v189
      %v451 = vunpack.c.l.b16 %v190
      %v452 = vunpack.c.l.b16 %v191
      %v453 = vunpack.c.l.b16 %v192
      %v454 = vunpack.c.l.b16 %v193
      %v455 = vunpack.c.l.b16 %v194
      %v456 = vunpack.c.l.b16 %v195
      %v457 = vunpack.c.l.b16 %v196
      %v458 = vunpack.c.l.b16 %v197
      %v459 = vunpack.c.l.b16 %v198
      %v460 = vunpack.c.l.b16 %v199
      %v461 = vunpack.c.l.b16 %v200
      %v462 = vunpack.c.l.b16 %v201
      %v463 = vunpack.c.l.b16 %v202
      %v464 = vunpack.c.l.b16 %v203
      %v465 = vunpack.c.l.b16 %v204
      %v466 = vunpack.c.l.b16 %v205
      %v467 = vunpack.c.l.b16 %v206
      %v468 = vunpack.c.l.b16 %v207
      %v469 = vunpack.c.l.b16 %v208
      %v470 = vunpack.c.l.b16 %v209
      %v471 = vunpack.c.l.b16 %v210
      %v472 = vunpack.c.l.b16 %v211
      %v473 = vunpack.c.l.b16 %v212
      %v474 = vunpack.c.l.b16 %v213
      %v475 = vunpack.c.l.b16 %v214
      %v476 = vunpack.c.l.b16 %v215
      %v477 = vunpack.c.l.b16 %v216
      %v478 = vunpack.c.l.b16 %v217
      %v479 = vunpack.c.l.b16 %v218
      %v480 = vunpack.c.l.b16 %v219
      %v481 = vunpack.c.l.b16 %v220
      %v482 = vunpack.c.l.b16 %v221
      %v483 = vunpack.c.l.b16 %v222
      %v484 = vunpack.c.l.b16 %v223
      %v485 = vunpack.c.l.b16 %v224
      %v486 = vunpack.c.l.b16 %v225
      %v487 = vunpack.c.l.b16 %v226
      %v488 = vunpack.c.l.b16 %v227
      %v489 = vunpack.c.l.b16 %v228
      %v490 = vunpack.c.l.b16 %v229
      %v491 = vunpack.c.l.b16 %v230
      %v492 = vunpack.c.l.b16 %v231
      %v493 = vunpack.c.l.b16 %v232
      %v494 = vunpack.c.l.b16 %v233
      %v495 = vunpack.c.l.b16 %v234
      %v496 = vunpack.c.l.b16 %v235
      %v497 = vunpack.c.l.b16 %v236
      %v498 = vunpack.c.l.b16 %v237
      %v499 = vunpack.c.l.b16 %v238
      %v500 = vunpack.c.l.b16 %v239
      %v501 = vunpack.c.l.b16 %v240
      %v502 = vunpack.c.l.b16 %v241
      %v503 = vunpack.c.l.b16 %v242
      %v504 = vunpack.c.l.b16 %v243
      %v505 = vunpack.c.l.b16 %v244
      %v506 = vunpack.c.l.b16 %v245
      %v507 = vunpack.c.l.b16 %v246
      %v508 = vunpack.c.l.b16 %v247
      %v509 = vunpack.c.l.b16 %v248
      %v510 = vunpack.c.l.b16 %v249
      %v511 = vunpack.c.l.b16 %v250
      %v512 = vunpack.c.l.b16 %v251
      %v513 = vunpack.c.l.b16 %v252
      %v514 = vunpack.c.l.b16 %v253
      %v515 = vunpack.c.l.b16 %v254
      %v516 = vunpack.c.l.b16 %v255
      %v517 = vunpack.c.l.b16 %v256
      %v518 = vunpack.c.l.b16 %v257
      %v519 = vunpack.c.l.b16 %v258
      %v520 = vunpack.c.l.b16 %v259
      %v521 = vunpack.c.l.b16 %v260
      %v522 = vunpack.c.l.b16 %v261
      %v523 = vunpack.c.l.b16 %v262
      %v524 = vunpack.c.l.b16 %v263
      %v525 = vunpack.c.l.b16 %v264
      %v526 = vunpack.c.l.b16 %v265
      %v527 = vunpack.c.l.b16 %v266
      %v528 = vunpack.c.l.b16 %v267
      %v529 = vunpack.c.l.b16 %v268
      %v530 = vunpack.c.l.b16 %v269
      %v531 = vunpack.c.l.b16 %v270
      %v532 = vunpack.c.l.b16 %v271
      %v533 = vunpack.c.l.b16 %v272
      %v534 = vunpack.c.l.b16 %v273
      %v535 = vunpack.c.l.b16 %v274
      %v536 = vunpack.c.l.b16 %v275
      %v537 = vunpack.c.l.b16 %v276
      %v538 = vunpack.c.l.b16 %v277
      %v539 = vunpack.c.l.b16 %v278
      %v540 = vunpack.c.l.b16 %v279
      %v541 = vunpack.c.l.b16 %v280
      %v542 = vunpack.c.l.b16 %v281
      %v543 = vunpack.c.l.b16 %v282
      %v544 = vunpack.c.l.b16 %v283
      %v545 = vunpack.c.l.b16 %v284
      %v546 = vunpack.c.l.b16 %v285
      %v547 = vunpack.c.l.b16 %v286
      %v548 = vunpack.c.l.b16 %v287
      %v549 = vunpack.c.l.b16 %v288
      %v550 = vunpack.c.l.b16 %v289
      %v551 = vunpack.c.l.b16 %v290
      %v552 = vunpack.c.l.b16 %v291
      %v553 = vunpack.c.l.b16 %v292
      %v554 = vunpack.c.l.b16 %v293
      %v555 = vunpack.c.l.b16 %v294
      %v556 = vunpack.c.l.b16 %v295
      %v557 = vunpack.c.l.b16 %v296
      %v558 = vunpack.c.l.b16 %v297
      %v559 = vunpack.c.l.b16 %v298
      %v560 = vunpack.c.l.b16 %v299
      %v561 = vunpack.c.l.b16 %v300
      %v562 = vunpack.c.l.b16 %v301
      %v563 = vunpack.c.l.b16 %v302
      %v564 = vpack.c.b16 %v437, %v436
      %v565 = vpack.c.b16 %v439, %v438
      %v566 = vpack.c.b16 %v441, %v440
      %v567 = vpack.c.b16 %v443, %v442
      %v568 = vpack.c.b16 %v445, %v444
      %v569 = vpack.c.b16 %v447, %v446
      %v570 = vpack.c.b16 %v449, %v448
      %v571 = vpack.c.b16 %v451, %v450
      %v572 = vpack.c.b16 %v453, %v452
      %v573 = vpack.c.b16 %v455, %v454
      %v574 = vpack.c.b16 %v457, %v456
      %v575 = vpack.c.b16 %v459, %v458
      %v576 = vpack.c.b16 %v461, %v460
      %v577 = vpack.c.b16 %v463, %v462
      %v578 = vpack.c.b16 %v465, %v464
      %v579 = vpack.c.b16 %v467, %v466
      %v580 = vpack.c.b16 %v469, %v468
      %v581 = vpack.c.b16 %v471, %v470
      %v582 = vpack.c.b16 %v473, %v472
      %v583 = vpack.c.b16 %v475, %v474
      %v584 = vpack.c.b16 %v477, %v476
      %v585 = vpack.c.b16 %v479, %v478
      %v586 = vpack.c.b16 %v481, %v480
      %v587 = vpack.c.b16 %v483, %v482
      %v588 = vpack.c.b16 %v485, %v484
      %v589 = vpack.c.b16 %v487, %v486
      %v590 = vpack.c.b16 %v489, %v488
      %v591 = vpack.c.b16 %v491, %v490
      %v592 = vpack.c.b16 %v493, %v492
      %v593 = vpack.c.b16 %v495, %v494
      %v594 = vpack.c.b16 %v497, %v496
      %v595 = vpack.c.b16 %v499, %v498
      %v596 = vpack.c.b16 %v501, %v500
      %v597 = vpack.c.b16 %v503, %v502
      %v598 = vpack.c.b16 %v505, %v504
      %v599 = vpack.c.b16 %v507, %v506
      %v600 = vpack.c.b16 %v509, %v508
      %v601 = vpack.c.b16 %v511, %v510
      %v602 = vpack.c.b16 %v513, %v512
      %v603 = vpack.c.b16 %v515, %v514
      %v604 = vpack.c.b16 %v517, %v516
      %v605 = vpack.c.b16 %v519, %v518
      %v606 = vpack.c.b16 %v521, %v520
      %v607 = vpack.c.b16 %v523, %v522
      %v608 = vpack.c.b16 %v525, %v524
      %v609 = vpack.c.b16 %v527, %v526
      %v610 = vpack.c.b16 %v529, %v528
      %v611 = vpack.c.b16 %v531, %v530
      %v612 = vpack.c.b16 %v533, %v532
      %v613 = vpack.c.b16 %v535, %v534
      %v614 = vpack.c.b16 %v537, %v536
      %v615 = vpack.c.b16 %v539, %v538
      %v616 = vpack.c.b16 %v541, %v540
      %v617 = vpack.c.b16 %v543, %v542
      %v618 = vpack.c.b16 %v545, %v544
      %v619 = vpack.c.b16 %v547, %v546
      %v620 = vpack.c.b16 %v549, %v548
      %v621 = vpack.c.b16 %v551, %v550
      %v622 = vpack.c.b16 %v553, %v552
      %v623 = vpack.c.b16 %v555, %v554
      %v624 = vpack.c.b16 %v557, %v556
      %v625 = vpack.c.b16 %v559, %v558
      %v626 = vpack.c.b16 %v561, %v560
      %v627 = vpack.c.b16 %v563, %v562
      %v633 = vunpack.c.l.b16 %v303
      %v634 = vunpack.c.l.b16 %v304
      %v635 = vunpack.c.l.b16 %v305
      %v636 = vunpack.c.l.b16 %v306
      %v637 = vunpack.c.l.b16 %v307
      %v638 = vpack.c.b16 %v634, %v633
      %v639 = vpack.c.b16 %v636, %v635
      %v640 = vpack.c.b16 %v637, %v637
      %vm643 = vcmask 326656
      %v645 = vsel %vm643, %v564, 0
      %v648 = vsel %vm643, %v565, 0
      %v651 = vsel %vm643, %v566, 0
      %v654 = vsel %vm643, %v567, 0
      %v657 = vsel %vm643, %v568, 0
      %v660 = vsel %vm643, %v569, 0
      %v663 = vsel %vm643, %v570, 0
      %v666 = vsel %vm643, %v571, 0
      %v669 = vsel %vm643, %v572, 0
      %v672 = vsel %vm643, %v573, 0
      %v675 = vsel %vm643, %v574, 0
      %v678 = vsel %vm643, %v575, 0
      %v681 = vsel %vm643, %v576, 0
      %v684 = vsel %vm643, %v577, 0
      %v687 = vsel %vm643, %v578, 0
      %v690 = vsel %vm643, %v579, 0
      %v693 = vsel %vm643, %v580, 0
      %v696 = vsel %vm643, %v581, 0
      %v699 = vsel %vm643, %v582, 0
      %v702 = vsel %vm643, %v583, 0
      %v705 = vsel %vm643, %v584, 0
      %v708 = vsel %vm643, %v585, 0
      %v711 = vsel %vm643, %v586, 0
      %v714 = vsel %vm643, %v587, 0
      %v717 = vsel %vm643, %v588, 0
      %v720 = vsel %vm643, %v589, 0
      %v723 = vsel %vm643, %v590, 0
      %v726 = vsel %vm643, %v591, 0
      %v729 = vsel %vm643, %v592, 0
      %v732 = vsel %vm643, %v593, 0
      %v735 = vsel %vm643, %v594, 0
      %v738 = vsel %vm643, %v595, 0
      %v741 = vsel %vm643, %v596, 0
      %v744 = vsel %vm643, %v597, 0
      %v747 = vsel %vm643, %v598, 0
      %v750 = vsel %vm643, %v599, 0
      %v753 = vsel %vm643, %v600, 0
      %v756 = vsel %vm643, %v601, 0
      %v759 = vsel %vm643, %v602, 0
      %v762 = vsel %vm643, %v603, 0
      %v765 = vsel %vm643, %v604, 0
      %v768 = vsel %vm643, %v605, 0
      %v771 = vsel %vm643, %v606, 0
      %v774 = vsel %vm643, %v607, 0
      %v777 = vsel %vm643, %v608, 0
      %v780 = vsel %vm643, %v609, 0
      %v783 = vsel %vm643, %v610, 0
      %v786 = vsel %vm643, %v611, 0
      %v789 = vsel %vm643, %v612, 0
      %v792 = vsel %vm643, %v613, 0
      %v795 = vsel %vm643, %v614, 0
      %v798 = vsel %vm643, %v615, 0
      %v801 = vsel %vm643, %v616, 0
      %v804 = vsel %vm643, %v617, 0
      %v807 = vsel %vm643, %v618, 0
      %v810 = vsel %vm643, %v619, 0
      %v813 = vsel %vm643, %v620, 0
      %v816 = vsel %vm643, %v621, 0
      %v819 = vsel %vm643, %v622, 0
      %v822 = vsel %vm643, %v623, 0
      %v825 = vsel %vm643, %v624, 0
      %v828 = vsel %vm643, %v625, 0
      %v831 = vsel %vm643, %v626, 0
      %v834 = vsel %vm643, %v627, 0
      %vm836 = vcmask 1043456
      %v838 = vsel %vm836, %v640, 0
      %840 = vmatprep.subr.bf16.mxu0 0
      %841 = vmatpush1.bf16.msra.mxu0 %v638
      %842 = vmatprep.subr.bf16.mxu0 0
      %843 = vmatpush1.bf16.msra.mxu0 %v639
      %844 = vmatprep.subr.bf16.mxu0 0
      %845 = vmatpush1.bf16.msra.mxu0 %v838
      %846 = vmatprep.subr.bf16.mxu0 0
      %847 = vmatpush1.bf16.msra.mxu0 0
      %848 = vmatprep.subr.bf16.mxu0 0
      %849 = vmatpush1.bf16.msra.mxu0 0
      %850 = vmatprep.subr.bf16.mxu0 0
      %851 = vmatpush1.bf16.msra.mxu0 0
      %852 = vmatprep.subr.bf16.mxu0 0
      %853 = vmatpush1.bf16.msra.mxu0 0
      %854 = vmatprep.subr.bf16.mxu0 0
      %855 = vmatpush1.bf16.msra.mxu0 0
      %856 = vmatprep.subr.bf16.mxu0 0
      %857 = vmatpush1.bf16.msra.mxu0 0
      %858 = vmatprep.subr.bf16.mxu0 0
      %859 = vmatpush1.bf16.msra.mxu0 0
      %860 = vmatprep.subr.bf16.mxu0 0
      %861 = vmatpush1.bf16.msra.mxu0 0
      %862 = vmatprep.subr.bf16.mxu0 0
      %863 = vmatpush1.bf16.msra.mxu0 0
      %864 = vmatprep.subr.bf16.mxu0 0
      %865 = vmatpush1.bf16.msra.mxu0 0
      %866 = vmatprep.subr.bf16.mxu0 0
      %867 = vmatpush1.bf16.msra.mxu0 0
      %868 = vmatprep.subr.bf16.mxu0 0
      %869 = vmatpush1.bf16.msra.mxu0 0
      %870 = vmatprep.subr.bf16.mxu0 0
      %871 = vmatpush1.bf16.msra.mxu0 0
      %872 = vmatprep.mubr.bf16.mxu0 0
      %873 = vmatmul.mubr.bf16.gmra.mrb[0].mxu0 %v645
      %v874 = vpop.f32.mrb[0].mxu0
      %v875 = vadd.f32 0.0, %v874
      %v876 = vpop.f32.mrb[0].mxu0
      %v877 = vpop.f32.mrb[0].mxu0
      %v878 = vadd.f32 0.0, %v877
      %v879 = vpop.f32.mrb[0].mxu0
      %880 = vmatprep.mubr.bf16.mxu0 0
      %881 = vmatmul.mubr.bf16.gmra.mrb[0].mxu0 %v648
      %v882 = vpop.f32.mrb[0].mxu0
      %v883 = vadd.f32 0.0, %v882
      %v884 = vpop.f32.mrb[0].mxu0
      %v885 = vpop.f32.mrb[0].mxu0
      %v886 = vadd.f32 0.0, %v885
      %v887 = vpop.f32.mrb[0].mxu0
      %888 = vmatprep.mubr.bf16.mxu0 0
      %889 = vmatmul.mubr.bf16.gmra.mrb[0].mxu0 %v651
      %v890 = vpop.f32.mrb[0].mxu0
      %v891 = vadd.f32 0.0, %v890
      %v892 = vpop.f32.mrb[0].mxu0
      %v893 = vpop.f32.mrb[0].mxu0
      %v894 = vadd.f32 0.0, %v893
      %v895 = vpop.f32.mrb[0].mxu0
      %896 = vmatprep.mubr.bf16.mxu0 0
      %897 = vmatmul.mubr.bf16.gmra.mrb[0].mxu0 %v654
      %v898 = vpop.f32.mrb[0].mxu0
      %v899 = vadd.f32 0.0, %v898
      %v900 = vpop.f32.mrb[0].mxu0
      %v901 = vpop.f32.mrb[0].mxu0
      %v902 = vadd.f32 0.0, %v901
      %v903 = vpop.f32.mrb[0].mxu0
      %904 = vmatprep.mubr.bf16.mxu0 0
      %905 = vmatmul.mubr.bf16.gmra.mrb[0].mxu0 %v657
      %v906 = vpop.f32.mrb[0].mxu0
      %v907 = vadd.f32 0.0, %v906
      %v908 = vpop.f32.mrb[0].mxu0
      %v909 = vpop.f32.mrb[0].mxu0
      %v910 = vadd.f32 0.0, %v909
      %v911 = vpop.f32.mrb[0].mxu0
      %912 = vmatprep.mubr.bf16.mxu0 0
      %913 = vmatmul.mubr.bf16.gmra.mrb[0].mxu0 %v660
      %v914 = vpop.f32.mrb[0].mxu0
      %v915 = vadd.f32 0.0, %v914
      %v916 = vpop.f32.mrb[0].mxu0
      %v917 = vpop.f32.mrb[0].mxu0
      %v918 = vadd.f32 0.0, %v917
      %v919 = vpop.f32.mrb[0].mxu0
      %920 = vmatprep.mubr.bf16.mxu0 0
      %921 = vmatmul.mubr.bf16.gmra.mrb[0].mxu0 %v663
      %v922 = vpop.f32.mrb[0].mxu0
      %v923 = vadd.f32 0.0, %v922
      %v924 = vpop.f32.mrb[0].mxu0
      %v925 = vpop.f32.mrb[0].mxu0
      %v926 = vadd.f32 0.0, %v925
      %v927 = vpop.f32.mrb[0].mxu0
      %928 = vmatprep.mubr.bf16.mxu0 0
      %929 = vmatmul.mubr.bf16.gmra.mrb[0].mxu0 %v666
      %v930 = vpop.f32.mrb[0].mxu0
      %v931 = vadd.f32 0.0, %v930
      %v932 = vpop.f32.mrb[0].mxu0
      %v933 = vpop.f32.mrb[0].mxu0
      %v934 = vadd.f32 0.0, %v933
      %v935 = vpop.f32.mrb[0].mxu0
      %936 = vmatprep.mubr.bf16.mxu0 0
      %937 = vmatmul.mubr.bf16.gmra.mrb[0].mxu0 %v669
      %v938 = vpop.f32.mrb[0].mxu0
      %v939 = vadd.f32 0.0, %v938
      %v940 = vpop.f32.mrb[0].mxu0
      %v941 = vpop.f32.mrb[0].mxu0
      %v942 = vadd.f32 0.0, %v941
      %v943 = vpop.f32.mrb[0].mxu0
      %944 = vmatprep.mubr.bf16.mxu0 0
      %945 = vmatmul.mubr.bf16.gmra.mrb[0].mxu0 %v672
      %v946 = vpop.f32.mrb[0].mxu0
      %v947 = vadd.f32 0.0, %v946
      %v948 = vpop.f32.mrb[0].mxu0
      %v949 = vpop.f32.mrb[0].mxu0
      %v950 = vadd.f32 0.0, %v949
      %v951 = vpop.f32.mrb[0].mxu0
      %952 = vmatprep.mubr.bf16.mxu0 0
      %953 = vmatmul.mubr.bf16.gmra.mrb[0].mxu0 %v675
      %v954 = vpop.f32.mrb[0].mxu0
      %v955 = vadd.f32 0.0, %v954
      %v956 = vpop.f32.mrb[0].mxu0
      %v957 = vpop.f32.mrb[0].mxu0
      %v958 = vadd.f32 0.0, %v957
      %v959 = vpop.f32.mrb[0].mxu0
      %960 = vmatprep.mubr.bf16.mxu0 0
      %961 = vmatmul.mubr.bf16.gmra.mrb[0].mxu0 %v678
      %v962 = vpop.f32.mrb[0].mxu0
      %v963 = vadd.f32 0.0, %v962
      %v964 = vpop.f32.mrb[0].mxu0
      %v965 = vpop.f32.mrb[0].mxu0
      %v966 = vadd.f32 0.0, %v965
      %v967 = vpop.f32.mrb[0].mxu0
      %968 = vmatprep.mubr.bf16.mxu0 0
      %969 = vmatmul.mubr.bf16.gmra.mrb[0].mxu0 %v681
      %v970 = vpop.f32.mrb[0].mxu0
      %v971 = vadd.f32 0.0, %v970
      %v972 = vpop.f32.mrb[0].mxu0
      %v973 = vpop.f32.mrb[0].mxu0
      %v974 = vadd.f32 0.0, %v973
      %v975 = vpop.f32.mrb[0].mxu0
      %976 = vmatprep.mubr.bf16.mxu0 0
      %977 = vmatmul.mubr.bf16.gmra.mrb[0].mxu0 %v684
      %v978 = vpop.f32.mrb[0].mxu0
      %v979 = vadd.f32 0.0, %v978
      %v980 = vpop.f32.mrb[0].mxu0
      %v981 = vpop.f32.mrb[0].mxu0
      %v982 = vadd.f32 0.0, %v981
      %v983 = vpop.f32.mrb[0].mxu0
      %984 = vmatprep.mubr.bf16.mxu0 0
      %985 = vmatmul.mubr.bf16.gmra.mrb[0].mxu0 %v687
      %v986 = vpop.f32.mrb[0].mxu0
      %v987 = vadd.f32 0.0, %v986
      %v988 = vpop.f32.mrb[0].mxu0
      %v989 = vpop.f32.mrb[0].mxu0
      %v990 = vadd.f32 0.0, %v989
      %v991 = vpop.f32.mrb[0].mxu0
      %992 = vmatprep.mubr.bf16.mxu0 0
      %993 = vmatmul.mubr.bf16.gmra.mrb[0].mxu0 %v690
      %v994 = vpop.f32.mrb[0].mxu0
      %v995 = vadd.f32 0.0, %v994
      %v996 = vpop.f32.mrb[0].mxu0
      %v997 = vpop.f32.mrb[0].mxu0
      %v998 = vadd.f32 0.0, %v997
      %v999 = vpop.f32.mrb[0].mxu0
      %1000 = vmatprep.mubr.bf16.mxu0 0
      %1001 = vmatmul.mubr.bf16.gmra.mrb[0].mxu0 %v693
      %v1002 = vpop.f32.mrb[0].mxu0
      %v1003 = vadd.f32 0.0, %v1002
      %v1004 = vpop.f32.mrb[0].mxu0
      %v1005 = vpop.f32.mrb[0].mxu0
      %v1006 = vadd.f32 0.0, %v1005
      %v1007 = vpop.f32.mrb[0].mxu0
      %1008 = vmatprep.mubr.bf16.mxu0 0
      %1009 = vmatmul.mubr.bf16.gmra.mrb[0].mxu0 %v696
      %v1010 = vpop.f32.mrb[0].mxu0
      %v1011 = vadd.f32 0.0, %v1010
      %v1012 = vpop.f32.mrb[0].mxu0
      %v1013 = vpop.f32.mrb[0].mxu0
      %v1014 = vadd.f32 0.0, %v1013
      %v1015 = vpop.f32.mrb[0].mxu0
      %1016 = vmatprep.mubr.bf16.mxu0 0
      %1017 = vmatmul.mubr.bf16.gmra.mrb[0].mxu0 %v699
      %v1018 = vpop.f32.mrb[0].mxu0
      %v1019 = vadd.f32 0.0, %v1018
      %v1020 = vpop.f32.mrb[0].mxu0
      %v1021 = vpop.f32.mrb[0].mxu0
      %v1022 = vadd.f32 0.0, %v1021
      %v1023 = vpop.f32.mrb[0].mxu0
      %1024 = vmatprep.mubr.bf16.mxu0 0
      %1025 = vmatmul.mubr.bf16.gmra.mrb[0].mxu0 %v702
      %v1026 = vpop.f32.mrb[0].mxu0
      %v1027 = vadd.f32 0.0, %v1026
      %v1028 = vpop.f32.mrb[0].mxu0
      %v1029 = vpop.f32.mrb[0].mxu0
      %v1030 = vadd.f32 0.0, %v1029
      %v1031 = vpop.f32.mrb[0].mxu0
      %1032 = vmatprep.mubr.bf16.mxu0 0
      %1033 = vmatmul.mubr.bf16.gmra.mrb[0].mxu0 %v705
      %v1034 = vpop.f32.mrb[0].mxu0
      %v1035 = vadd.f32 0.0, %v1034
      %v1036 = vpop.f32.mrb[0].mxu0
      %v1037 = vpop.f32.mrb[0].mxu0
      %v1038 = vadd.f32 0.0, %v1037
      %v1039 = vpop.f32.mrb[0].mxu0
      %1040 = vmatprep.mubr.bf16.mxu0 0
      %1041 = vmatmul.mubr.bf16.gmra.mrb[0].mxu0 %v708
      %v1042 = vpop.f32.mrb[0].mxu0
      %v1043 = vadd.f32 0.0, %v1042
      %v1044 = vpop.f32.mrb[0].mxu0
      %v1045 = vpop.f32.mrb[0].mxu0
      %v1046 = vadd.f32 0.0, %v1045
      %v1047 = vpop.f32.mrb[0].mxu0
      %1048 = vmatprep.mubr.bf16.mxu0 0
      %1049 = vmatmul.mubr.bf16.gmra.mrb[0].mxu0 %v711
      %v1050 = vpop.f32.mrb[0].mxu0
      %v1051 = vadd.f32 0.0, %v1050
      %v1052 = vpop.f32.mrb[0].mxu0
      %v1053 = vpop.f32.mrb[0].mxu0
      %v1054 = vadd.f32 0.0, %v1053
      %v1055 = vpop.f32.mrb[0].mxu0
      %1056 = vmatprep.mubr.bf16.mxu0 0
      %1057 = vmatmul.mubr.bf16.gmra.mrb[0].mxu0 %v714
      %v1058 = vpop.f32.mrb[0].mxu0
      %v1059 = vadd.f32 0.0, %v1058
      %v1060 = vpop.f32.mrb[0].mxu0
      %v1061 = vpop.f32.mrb[0].mxu0
      %v1062 = vadd.f32 0.0, %v1061
      %v1063 = vpop.f32.mrb[0].mxu0
      %1064 = vmatprep.mubr.bf16.mxu0 0
      %1065 = vmatmul.mubr.bf16.gmra.mrb[0].mxu0 %v717
      %v1066 = vpop.f32.mrb[0].mxu0
      %v1067 = vadd.f32 0.0, %v1066
      %v1068 = vpop.f32.mrb[0].mxu0
      %v1069 = vpop.f32.mrb[0].mxu0
      %v1070 = vadd.f32 0.0, %v1069
      %v1071 = vpop.f32.mrb[0].mxu0
      %1072 = vmatprep.mubr.bf16.mxu0 0
      %1073 = vmatmul.mubr.bf16.gmra.mrb[0].mxu0 %v720
      %v1074 = vpop.f32.mrb[0].mxu0
      %v1075 = vadd.f32 0.0, %v1074
      %v1076 = vpop.f32.mrb[0].mxu0
      %v1077 = vpop.f32.mrb[0].mxu0
      %v1078 = vadd.f32 0.0, %v1077
      %v1079 = vpop.f32.mrb[0].mxu0
      %1080 = vmatprep.mubr.bf16.mxu0 0
      %1081 = vmatmul.mubr.bf16.gmra.mrb[0].mxu0 %v723
      %v1082 = vpop.f32.mrb[0].mxu0
      %v1083 = vadd.f32 0.0, %v1082
      %v1084 = vpop.f32.mrb[0].mxu0
      %v1085 = vpop.f32.mrb[0].mxu0
      %v1086 = vadd.f32 0.0, %v1085
      %v1087 = vpop.f32.mrb[0].mxu0
      %1088 = vmatprep.mubr.bf16.mxu0 0
      %1089 = vmatmul.mubr.bf16.gmra.mrb[0].mxu0 %v726
      %v1090 = vpop.f32.mrb[0].mxu0
      %v1091 = vadd.f32 0.0, %v1090
      %v1092 = vpop.f32.mrb[0].mxu0
      %v1093 = vpop.f32.mrb[0].mxu0
      %v1094 = vadd.f32 0.0, %v1093
      %v1095 = vpop.f32.mrb[0].mxu0
      %1096 = vmatprep.mubr.bf16.mxu0 0
      %1097 = vmatmul.mubr.bf16.gmra.mrb[0].mxu0 %v729
      %v1098 = vpop.f32.mrb[0].mxu0
      %v1099 = vadd.f32 0.0, %v1098
      %v1100 = vpop.f32.mrb[0].mxu0
      %v1101 = vpop.f32.mrb[0].mxu0
      %v1102 = vadd.f32 0.0, %v1101
      %v1103 = vpop.f32.mrb[0].mxu0
      %1104 = vmatprep.mubr.bf16.mxu0 0
      %1105 = vmatmul.mubr.bf16.gmra.mrb[0].mxu0 %v732
      %v1106 = vpop.f32.mrb[0].mxu0
      %v1107 = vadd.f32 0.0, %v1106
      %v1108 = vpop.f32.mrb[0].mxu0
      %v1109 = vpop.f32.mrb[0].mxu0
      %v1110 = vadd.f32 0.0, %v1109
      %v1111 = vpop.f32.mrb[0].mxu0
      %1112 = vmatprep.mubr.bf16.mxu0 0
      %1113 = vmatmul.mubr.bf16.gmra.mrb[0].mxu0 %v735
      %v1114 = vpop.f32.mrb[0].mxu0
      %v1115 = vadd.f32 0.0, %v1114
      %v1116 = vpop.f32.mrb[0].mxu0
      %v1117 = vpop.f32.mrb[0].mxu0
      %v1118 = vadd.f32 0.0, %v1117
      %v1119 = vpop.f32.mrb[0].mxu0
      %1120 = vmatprep.mubr.bf16.mxu0 0
      %1121 = vmatmul.mubr.bf16.gmra.mrb[0].mxu0 %v738
      %v1122 = vpop.f32.mrb[0].mxu0
      %v1123 = vadd.f32 0.0, %v1122
      %v1124 = vpop.f32.mrb[0].mxu0
      %v1125 = vpop.f32.mrb[0].mxu0
      %v1126 = vadd.f32 0.0, %v1125
      %v1127 = vpop.f32.mrb[0].mxu0
      %1128 = vmatprep.mubr.bf16.mxu0 0
      %1129 = vmatmul.mubr.bf16.gmra.mrb[0].mxu0 %v741
      %v1130 = vpop.f32.mrb[0].mxu0
      %v1131 = vadd.f32 0.0, %v1130
      %v1132 = vpop.f32.mrb[0].mxu0
      %v1133 = vpop.f32.mrb[0].mxu0
      %v1134 = vadd.f32 0.0, %v1133
      %v1135 = vpop.f32.mrb[0].mxu0
      %1136 = vmatprep.mubr.bf16.mxu0 0
      %1137 = vmatmul.mubr.bf16.gmra.mrb[0].mxu0 %v744
      %v1138 = vpop.f32.mrb[0].mxu0
      %v1139 = vadd.f32 0.0, %v1138
      %v1140 = vpop.f32.mrb[0].mxu0
      %v1141 = vpop.f32.mrb[0].mxu0
      %v1142 = vadd.f32 0.0, %v1141
      %v1143 = vpop.f32.mrb[0].mxu0
      %1144 = vmatprep.mubr.bf16.mxu0 0
      %1145 = vmatmul.mubr.bf16.gmra.mrb[0].mxu0 %v747
      %v1146 = vpop.f32.mrb[0].mxu0
      %v1147 = vadd.f32 0.0, %v1146
      %v1148 = vpop.f32.mrb[0].mxu0
      %v1149 = vpop.f32.mrb[0].mxu0
      %v1150 = vadd.f32 0.0, %v1149
      %v1151 = vpop.f32.mrb[0].mxu0
      %1152 = vmatprep.mubr.bf16.mxu0 0
      %1153 = vmatmul.mubr.bf16.gmra.mrb[0].mxu0 %v750
      %v1154 = vpop.f32.mrb[0].mxu0
      %v1155 = vadd.f32 0.0, %v1154
      %v1156 = vpop.f32.mrb[0].mxu0
      %v1157 = vpop.f32.mrb[0].mxu0
      %v1158 = vadd.f32 0.0, %v1157
      %v1159 = vpop.f32.mrb[0].mxu0
      %1160 = vmatprep.mubr.bf16.mxu0 0
      %1161 = vmatmul.mubr.bf16.gmra.mrb[0].mxu0 %v753
      %v1162 = vpop.f32.mrb[0].mxu0
      %v1163 = vadd.f32 0.0, %v1162
      %v1164 = vpop.f32.mrb[0].mxu0
      %v1165 = vpop.f32.mrb[0].mxu0
      %v1166 = vadd.f32 0.0, %v1165
      %v1167 = vpop.f32.mrb[0].mxu0
      %1168 = vmatprep.mubr.bf16.mxu0 0
      %1169 = vmatmul.mubr.bf16.gmra.mrb[0].mxu0 %v756
      %v1170 = vpop.f32.mrb[0].mxu0
      %v1171 = vadd.f32 0.0, %v1170
      %v1172 = vpop.f32.mrb[0].mxu0
      %v1173 = vpop.f32.mrb[0].mxu0
      %v1174 = vadd.f32 0.0, %v1173
      %v1175 = vpop.f32.mrb[0].mxu0
      %1176 = vmatprep.mubr.bf16.mxu0 0
      %1177 = vmatmul.mubr.bf16.gmra.mrb[0].mxu0 %v759
      %v1178 = vpop.f32.mrb[0].mxu0
      %v1179 = vadd.f32 0.0, %v1178
      %v1180 = vpop.f32.mrb[0].mxu0
      %v1181 = vpop.f32.mrb[0].mxu0
      %v1182 = vadd.f32 0.0, %v1181
      %v1183 = vpop.f32.mrb[0].mxu0
      %1184 = vmatprep.mubr.bf16.mxu0 0
      %1185 = vmatmul.mubr.bf16.gmra.mrb[0].mxu0 %v762
      %v1186 = vpop.f32.mrb[0].mxu0
      %v1187 = vadd.f32 0.0, %v1186
      %v1188 = vpop.f32.mrb[0].mxu0
      %v1189 = vpop.f32.mrb[0].mxu0
      %v1190 = vadd.f32 0.0, %v1189
      %v1191 = vpop.f32.mrb[0].mxu0
      %1192 = vmatprep.mubr.bf16.mxu0 0
      %1193 = vmatmul.mubr.bf16.gmra.mrb[0].mxu0 %v765
      %v1194 = vpop.f32.mrb[0].mxu0
      %v1195 = vadd.f32 0.0, %v1194
      %v1196 = vpop.f32.mrb[0].mxu0
      %v1197 = vpop.f32.mrb[0].mxu0
      %v1198 = vadd.f32 0.0, %v1197
      %v1199 = vpop.f32.mrb[0].mxu0
      %1200 = vmatprep.mubr.bf16.mxu0 0
      %1201 = vmatmul.mubr.bf16.gmra.mrb[0].mxu0 %v768
      %v1202 = vpop.f32.mrb[0].mxu0
      %v1203 = vadd.f32 0.0, %v1202
      %v1204 = vpop.f32.mrb[0].mxu0
      %v1205 = vpop.f32.mrb[0].mxu0
      %v1206 = vadd.f32 0.0, %v1205
      %v1207 = vpop.f32.mrb[0].mxu0
      %1208 = vmatprep.mubr.bf16.mxu0 0
      %1209 = vmatmul.mubr.bf16.gmra.mrb[0].mxu0 %v771
      %v1210 = vpop.f32.mrb[0].mxu0
      %v1211 = vadd.f32 0.0, %v1210
      %v1212 = vpop.f32.mrb[0].mxu0
      %v1213 = vpop.f32.mrb[0].mxu0
      %v1214 = vadd.f32 0.0, %v1213
      %v1215 = vpop.f32.mrb[0].mxu0
      %1216 = vmatprep.mubr.bf16.mxu0 0
      %1217 = vmatmul.mubr.bf16.gmra.mrb[0].mxu0 %v774
      %v1218 = vpop.f32.mrb[0].mxu0
      %v1219 = vadd.f32 0.0, %v1218
      %v1220 = vpop.f32.mrb[0].mxu0
      %v1221 = vpop.f32.mrb[0].mxu0
      %v1222 = vadd.f32 0.0, %v1221
      %v1223 = vpop.f32.mrb[0].mxu0
      %1224 = vmatprep.mubr.bf16.mxu0 0
      %1225 = vmatmul.mubr.bf16.gmra.mrb[0].mxu0 %v777
      %v1226 = vpop.f32.mrb[0].mxu0
      %v1227 = vadd.f32 0.0, %v1226
      %v1228 = vpop.f32.mrb[0].mxu0
      %v1229 = vpop.f32.mrb[0].mxu0
      %v1230 = vadd.f32 0.0, %v1229
      %v1231 = vpop.f32.mrb[0].mxu0
      %1232 = vmatprep.mubr.bf16.mxu0 0
      %1233 = vmatmul.mubr.bf16.gmra.mrb[0].mxu0 %v780
      %v1234 = vpop.f32.mrb[0].mxu0
      %v1235 = vadd.f32 0.0, %v1234
      %v1236 = vpop.f32.mrb[0].mxu0
      %v1237 = vpop.f32.mrb[0].mxu0
      %v1238 = vadd.f32 0.0, %v1237
      %v1239 = vpop.f32.mrb[0].mxu0
      %1240 = vmatprep.mubr.bf16.mxu0 0
      %1241 = vmatmul.mubr.bf16.gmra.mrb[0].mxu0 %v783
      %v1242 = vpop.f32.mrb[0].mxu0
      %v1243 = vadd.f32 0.0, %v1242
      %v1244 = vpop.f32.mrb[0].mxu0
      %v1245 = vpop.f32.mrb[0].mxu0
      %v1246 = vadd.f32 0.0, %v1245
      %v1247 = vpop.f32.mrb[0].mxu0
      %1248 = vmatprep.mubr.bf16.mxu0 0
      %1249 = vmatmul.mubr.bf16.gmra.mrb[0].mxu0 %v786
      %v1250 = vpop.f32.mrb[0].mxu0
      %v1251 = vadd.f32 0.0, %v1250
      %v1252 = vpop.f32.mrb[0].mxu0
      %v1253 = vpop.f32.mrb[0].mxu0
      %v1254 = vadd.f32 0.0, %v1253
      %v1255 = vpop.f32.mrb[0].mxu0
      %1256 = vmatprep.mubr.bf16.mxu0 0
      %1257 = vmatmul.mubr.bf16.gmra.mrb[0].mxu0 %v789
      %v1258 = vpop.f32.mrb[0].mxu0
      %v1259 = vadd.f32 0.0, %v1258
      %v1260 = vpop.f32.mrb[0].mxu0
      %v1261 = vpop.f32.mrb[0].mxu0
      %v1262 = vadd.f32 0.0, %v1261
      %v1263 = vpop.f32.mrb[0].mxu0
      %1264 = vmatprep.mubr.bf16.mxu0 0
      %1265 = vmatmul.mubr.bf16.gmra.mrb[0].mxu0 %v792
      %v1266 = vpop.f32.mrb[0].mxu0
      %v1267 = vadd.f32 0.0, %v1266
      %v1268 = vpop.f32.mrb[0].mxu0
      %v1269 = vpop.f32.mrb[0].mxu0
      %v1270 = vadd.f32 0.0, %v1269
      %v1271 = vpop.f32.mrb[0].mxu0
      %1272 = vmatprep.mubr.bf16.mxu0 0
      %1273 = vmatmul.mubr.bf16.gmra.mrb[0].mxu0 %v795
      %v1274 = vpop.f32.mrb[0].mxu0
      %v1275 = vadd.f32 0.0, %v1274
      %v1276 = vpop.f32.mrb[0].mxu0
      %v1277 = vpop.f32.mrb[0].mxu0
      %v1278 = vadd.f32 0.0, %v1277
      %v1279 = vpop.f32.mrb[0].mxu0
      %1280 = vmatprep.mubr.bf16.mxu0 0
      %1281 = vmatmul.mubr.bf16.gmra.mrb[0].mxu0 %v798
      %v1282 = vpop.f32.mrb[0].mxu0
      %v1283 = vadd.f32 0.0, %v1282
      %v1284 = vpop.f32.mrb[0].mxu0
      %v1285 = vpop.f32.mrb[0].mxu0
      %v1286 = vadd.f32 0.0, %v1285
      %v1287 = vpop.f32.mrb[0].mxu0
      %1288 = vmatprep.mubr.bf16.mxu0 0
      %1289 = vmatmul.mubr.bf16.gmra.mrb[0].mxu0 %v801
      %v1290 = vpop.f32.mrb[0].mxu0
      %v1291 = vadd.f32 0.0, %v1290
      %v1292 = vpop.f32.mrb[0].mxu0
      %v1293 = vpop.f32.mrb[0].mxu0
      %v1294 = vadd.f32 0.0, %v1293
      %v1295 = vpop.f32.mrb[0].mxu0
      %1296 = vmatprep.mubr.bf16.mxu0 0
      %1297 = vmatmul.mubr.bf16.gmra.mrb[0].mxu0 %v804
      %v1298 = vpop.f32.mrb[0].mxu0
      %v1299 = vadd.f32 0.0, %v1298
      %v1300 = vpop.f32.mrb[0].mxu0
      %v1301 = vpop.f32.mrb[0].mxu0
      %v1302 = vadd.f32 0.0, %v1301
      %v1303 = vpop.f32.mrb[0].mxu0
      %1304 = vmatprep.mubr.bf16.mxu0 0
      %1305 = vmatmul.mubr.bf16.gmra.mrb[0].mxu0 %v807
      %v1306 = vpop.f32.mrb[0].mxu0
      %v1307 = vadd.f32 0.0, %v1306
      %v1308 = vpop.f32.mrb[0].mxu0
      %v1309 = vpop.f32.mrb[0].mxu0
      %v1310 = vadd.f32 0.0, %v1309
      %v1311 = vpop.f32.mrb[0].mxu0
      %1312 = vmatprep.mubr.bf16.mxu0 0
      %1313 = vmatmul.mubr.bf16.gmra.mrb[0].mxu0 %v810
      %v1314 = vpop.f32.mrb[0].mxu0
      %v1315 = vadd.f32 0.0, %v1314
      %v1316 = vpop.f32.mrb[0].mxu0
      %v1317 = vpop.f32.mrb[0].mxu0
      %v1318 = vadd.f32 0.0, %v1317
      %v1319 = vpop.f32.mrb[0].mxu0
      %1320 = vmatprep.mubr.bf16.mxu0 0
      %1321 = vmatmul.mubr.bf16.gmra.mrb[0].mxu0 %v813
      %v1322 = vpop.f32.mrb[0].mxu0
      %v1323 = vadd.f32 0.0, %v1322
      %v1324 = vpop.f32.mrb[0].mxu0
      %v1325 = vpop.f32.mrb[0].mxu0
      %v1326 = vadd.f32 0.0, %v1325
      %v1327 = vpop.f32.mrb[0].mxu0
      %1328 = vmatprep.mubr.bf16.mxu0 0
      %1329 = vmatmul.mubr.bf16.gmra.mrb[0].mxu0 %v816
      %v1330 = vpop.f32.mrb[0].mxu0
      %v1331 = vadd.f32 0.0, %v1330
      %v1332 = vpop.f32.mrb[0].mxu0
      %v1333 = vpop.f32.mrb[0].mxu0
      %v1334 = vadd.f32 0.0, %v1333
      %v1335 = vpop.f32.mrb[0].mxu0
      %1336 = vmatprep.mubr.bf16.mxu0 0
      %1337 = vmatmul.mubr.bf16.gmra.mrb[0].mxu0 %v819
      %v1338 = vpop.f32.mrb[0].mxu0
      %v1339 = vadd.f32 0.0, %v1338
      %v1340 = vpop.f32.mrb[0].mxu0
      %v1341 = vpop.f32.mrb[0].mxu0
      %v1342 = vadd.f32 0.0, %v1341
      %v1343 = vpop.f32.mrb[0].mxu0
      %1344 = vmatprep.mubr.bf16.mxu0 0
      %1345 = vmatmul.mubr.bf16.gmra.mrb[0].mxu0 %v822
      %v1346 = vpop.f32.mrb[0].mxu0
      %v1347 = vadd.f32 0.0, %v1346
      %v1348 = vpop.f32.mrb[0].mxu0
      %v1349 = vpop.f32.mrb[0].mxu0
      %v1350 = vadd.f32 0.0, %v1349
      %v1351 = vpop.f32.mrb[0].mxu0
      %1352 = vmatprep.mubr.bf16.mxu0 0
      %1353 = vmatmul.mubr.bf16.gmra.mrb[0].mxu0 %v825
      %v1354 = vpop.f32.mrb[0].mxu0
      %v1355 = vadd.f32 0.0, %v1354
      %v1356 = vpop.f32.mrb[0].mxu0
      %v1357 = vpop.f32.mrb[0].mxu0
      %v1358 = vadd.f32 0.0, %v1357
      %v1359 = vpop.f32.mrb[0].mxu0
      %1360 = vmatprep.mubr.bf16.mxu0 0
      %1361 = vmatmul.mubr.bf16.gmra.mrb[0].mxu0 %v828
      %v1362 = vpop.f32.mrb[0].mxu0
      %v1363 = vadd.f32 0.0, %v1362
      %v1364 = vpop.f32.mrb[0].mxu0
      %v1365 = vpop.f32.mrb[0].mxu0
      %v1366 = vadd.f32 0.0, %v1365
      %v1367 = vpop.f32.mrb[0].mxu0
      %1368 = vmatprep.mubr.bf16.mxu0 0
      %1369 = vmatmul.mubr.bf16.gmra.mrb[0].mxu0 %v831
      %v1370 = vpop.f32.mrb[0].mxu0
      %v1371 = vadd.f32 0.0, %v1370
      %v1372 = vpop.f32.mrb[0].mxu0
      %v1373 = vpop.f32.mrb[0].mxu0
      %v1374 = vadd.f32 0.0, %v1373
      %v1375 = vpop.f32.mrb[0].mxu0
      %1376 = vmatprep.mubr.bf16.mxu0 0
      %1377 = vmatmul.mubr.bf16.gmra.mrb[0].mxu0 %v834
      %v1378 = vpop.f32.mrb[0].mxu0
      %v1379 = vadd.f32 0.0, %v1378
      %v1380 = vpop.f32.mrb[0].mxu0
      %v1381 = vpop.f32.mrb[0].mxu0
      %v1382 = vadd.f32 0.0, %v1381
      %v1383 = vpop.f32.mrb[0].mxu0
      %1384 = vdwg.mxu0
      %v1385 = vrot.slane %v875, 4
      %v1386 = vmax.f32 %v875, %v1385
      %v1387 = vrot.slane %v1386, 2
      %v1388 = vmax.f32 %v1386, %v1387
      %v1389 = vrot.slane %v1388, 1
      %v1390 = vmax.f32 %v1388, %v1389
      %v1391 = vrot.slane %v878, 4
      %v1392 = vmax.f32 %v878, %v1391
      %v1393 = vrot.slane %v1392, 2
      %v1394 = vmax.f32 %v1392, %v1393
      %v1395 = vrot.slane %v1394, 1
      %v1396 = vmax.f32 %v1394, %v1395
      %v1397 = vrot.slane %v883, 4
      %v1398 = vmax.f32 %v883, %v1397
      %v1399 = vrot.slane %v1398, 2
      %v1400 = vmax.f32 %v1398, %v1399
      %v1401 = vrot.slane %v1400, 1
      %v1402 = vmax.f32 %v1400, %v1401
      %v1403 = vrot.slane %v886, 4
      %v1404 = vmax.f32 %v886, %v1403
      %v1405 = vrot.slane %v1404, 2
      %v1406 = vmax.f32 %v1404, %v1405
      %v1407 = vrot.slane %v1406, 1
      %v1408 = vmax.f32 %v1406, %v1407
      %v1409 = vrot.slane %v891, 4
      %v1410 = vmax.f32 %v891, %v1409
      %v1411 = vrot.slane %v1410, 2
      %v1412 = vmax.f32 %v1410, %v1411
      %v1413 = vrot.slane %v1412, 1
      %v1414 = vmax.f32 %v1412, %v1413
      %v1415 = vrot.slane %v894, 4
      %v1416 = vmax.f32 %v894, %v1415
      %v1417 = vrot.slane %v1416, 2
      %v1418 = vmax.f32 %v1416, %v1417
      %v1419 = vrot.slane %v1418, 1
      %v1420 = vmax.f32 %v1418, %v1419
      %v1421 = vrot.slane %v899, 4
      %v1422 = vmax.f32 %v899, %v1421
      %v1423 = vrot.slane %v1422, 2
      %v1424 = vmax.f32 %v1422, %v1423
      %v1425 = vrot.slane %v1424, 1
      %v1426 = vmax.f32 %v1424, %v1425
      %v1427 = vrot.slane %v902, 4
      %v1428 = vmax.f32 %v902, %v1427
      %v1429 = vrot.slane %v1428, 2
      %v1430 = vmax.f32 %v1428, %v1429
      %v1431 = vrot.slane %v1430, 1
      %v1432 = vmax.f32 %v1430, %v1431
      %v1433 = vrot.slane %v907, 4
      %v1434 = vmax.f32 %v907, %v1433
      %v1435 = vrot.slane %v1434, 2
      %v1436 = vmax.f32 %v1434, %v1435
      %v1437 = vrot.slane %v1436, 1
      %v1438 = vmax.f32 %v1436, %v1437
      %v1439 = vrot.slane %v910, 4
      %v1440 = vmax.f32 %v910, %v1439
      %v1441 = vrot.slane %v1440, 2
      %v1442 = vmax.f32 %v1440, %v1441
      %v1443 = vrot.slane %v1442, 1
      %v1444 = vmax.f32 %v1442, %v1443
      %v1445 = vrot.slane %v915, 4
      %v1446 = vmax.f32 %v915, %v1445
      %v1447 = vrot.slane %v1446, 2
      %v1448 = vmax.f32 %v1446, %v1447
      %v1449 = vrot.slane %v1448, 1
      %v1450 = vmax.f32 %v1448, %v1449
      %v1451 = vrot.slane %v918, 4
      %v1452 = vmax.f32 %v918, %v1451
      %v1453 = vrot.slane %v1452, 2
      %v1454 = vmax.f32 %v1452, %v1453
      %v1455 = vrot.slane %v1454, 1
      %v1456 = vmax.f32 %v1454, %v1455
      %v1457 = vrot.slane %v923, 4
      %v1458 = vmax.f32 %v923, %v1457
      %v1459 = vrot.slane %v1458, 2
      %v1460 = vmax.f32 %v1458, %v1459
      %v1461 = vrot.slane %v1460, 1
      %v1462 = vmax.f32 %v1460, %v1461
      %v1463 = vrot.slane %v926, 4
      %v1464 = vmax.f32 %v926, %v1463
      %v1465 = vrot.slane %v1464, 2
      %v1466 = vmax.f32 %v1464, %v1465
      %v1467 = vrot.slane %v1466, 1
      %v1468 = vmax.f32 %v1466, %v1467
      %v1469 = vrot.slane %v931, 4
      %v1470 = vmax.f32 %v931, %v1469
      %v1471 = vrot.slane %v1470, 2
      %v1472 = vmax.f32 %v1470, %v1471
      %v1473 = vrot.slane %v1472, 1
      %v1474 = vmax.f32 %v1472, %v1473
      %v1475 = vrot.slane %v934, 4
      %v1476 = vmax.f32 %v934, %v1475
      %v1477 = vrot.slane %v1476, 2
      %v1478 = vmax.f32 %v1476, %v1477
      %v1479 = vrot.slane %v1478, 1
      %v1480 = vmax.f32 %v1478, %v1479
      %v1481 = vrot.slane %v939, 4
      %v1482 = vmax.f32 %v939, %v1481
      %v1483 = vrot.slane %v1482, 2
      %v1484 = vmax.f32 %v1482, %v1483
      %v1485 = vrot.slane %v1484, 1
      %v1486 = vmax.f32 %v1484, %v1485
      %v1487 = vrot.slane %v942, 4
      %v1488 = vmax.f32 %v942, %v1487
      %v1489 = vrot.slane %v1488, 2
      %v1490 = vmax.f32 %v1488, %v1489
      %v1491 = vrot.slane %v1490, 1
      %v1492 = vmax.f32 %v1490, %v1491
      %v1493 = vrot.slane %v947, 4
      %v1494 = vmax.f32 %v947, %v1493
      %v1495 = vrot.slane %v1494, 2
      %v1496 = vmax.f32 %v1494, %v1495
      %v1497 = vrot.slane %v1496, 1
      %v1498 = vmax.f32 %v1496, %v1497
      %v1499 = vrot.slane %v950, 4
      %v1500 = vmax.f32 %v950, %v1499
      %v1501 = vrot.slane %v1500, 2
      %v1502 = vmax.f32 %v1500, %v1501
      %v1503 = vrot.slane %v1502, 1
      %v1504 = vmax.f32 %v1502, %v1503
      %v1505 = vrot.slane %v955, 4
      %v1506 = vmax.f32 %v955, %v1505
      %v1507 = vrot.slane %v1506, 2
      %v1508 = vmax.f32 %v1506, %v1507
      %v1509 = vrot.slane %v1508, 1
      %v1510 = vmax.f32 %v1508, %v1509
      %v1511 = vrot.slane %v958, 4
      %v1512 = vmax.f32 %v958, %v1511
      %v1513 = vrot.slane %v1512, 2
      %v1514 = vmax.f32 %v1512, %v1513
      %v1515 = vrot.slane %v1514, 1
      %v1516 = vmax.f32 %v1514, %v1515
      %v1517 = vrot.slane %v963, 4
      %v1518 = vmax.f32 %v963, %v1517
      %v1519 = vrot.slane %v1518, 2
      %v1520 = vmax.f32 %v1518, %v1519
      %v1521 = vrot.slane %v1520, 1
      %v1522 = vmax.f32 %v1520, %v1521
      %v1523 = vrot.slane %v966, 4
      %v1524 = vmax.f32 %v966, %v1523
      %v1525 = vrot.slane %v1524, 2
      %v1526 = vmax.f32 %v1524, %v1525
      %v1527 = vrot.slane %v1526, 1
      %v1528 = vmax.f32 %v1526, %v1527
      %v1529 = vrot.slane %v971, 4
      %v1530 = vmax.f32 %v971, %v1529
      %v1531 = vrot.slane %v1530, 2
      %v1532 = vmax.f32 %v1530, %v1531
      %v1533 = vrot.slane %v1532, 1
      %v1534 = vmax.f32 %v1532, %v1533
      %v1535 = vrot.slane %v974, 4
      %v1536 = vmax.f32 %v974, %v1535
      %v1537 = vrot.slane %v1536, 2
      %v1538 = vmax.f32 %v1536, %v1537
      %v1539 = vrot.slane %v1538, 1
      %v1540 = vmax.f32 %v1538, %v1539
      %v1541 = vrot.slane %v979, 4
      %v1542 = vmax.f32 %v979, %v1541
      %v1543 = vrot.slane %v1542, 2
      %v1544 = vmax.f32 %v1542, %v1543
      %v1545 = vrot.slane %v1544, 1
      %v1546 = vmax.f32 %v1544, %v1545
      %v1547 = vrot.slane %v982, 4
      %v1548 = vmax.f32 %v982, %v1547
      %v1549 = vrot.slane %v1548, 2
      %v1550 = vmax.f32 %v1548, %v1549
      %v1551 = vrot.slane %v1550, 1
      %v1552 = vmax.f32 %v1550, %v1551
      %v1553 = vrot.slane %v987, 4
      %v1554 = vmax.f32 %v987, %v1553
      %v1555 = vrot.slane %v1554, 2
      %v1556 = vmax.f32 %v1554, %v1555
      %v1557 = vrot.slane %v1556, 1
      %v1558 = vmax.f32 %v1556, %v1557
      %v1559 = vrot.slane %v990, 4
      %v1560 = vmax.f32 %v990, %v1559
      %v1561 = vrot.slane %v1560, 2
      %v1562 = vmax.f32 %v1560, %v1561
      %v1563 = vrot.slane %v1562, 1
      %v1564 = vmax.f32 %v1562, %v1563
      %v1565 = vrot.slane %v995, 4
      %v1566 = vmax.f32 %v995, %v1565
      %v1567 = vrot.slane %v1566, 2
      %v1568 = vmax.f32 %v1566, %v1567
      %v1569 = vrot.slane %v1568, 1
      %v1570 = vmax.f32 %v1568, %v1569
      %v1571 = vrot.slane %v998, 4
      %v1572 = vmax.f32 %v998, %v1571
      %v1573 = vrot.slane %v1572, 2
      %v1574 = vmax.f32 %v1572, %v1573
      %v1575 = vrot.slane %v1574, 1
      %v1576 = vmax.f32 %v1574, %v1575
      %v1577 = vrot.slane %v1003, 4
      %v1578 = vmax.f32 %v1003, %v1577
      %v1579 = vrot.slane %v1578, 2
      %v1580 = vmax.f32 %v1578, %v1579
      %v1581 = vrot.slane %v1580, 1
      %v1582 = vmax.f32 %v1580, %v1581
      %v1583 = vrot.slane %v1006, 4
      %v1584 = vmax.f32 %v1006, %v1583
      %v1585 = vrot.slane %v1584, 2
      %v1586 = vmax.f32 %v1584, %v1585
      %v1587 = vrot.slane %v1586, 1
      %v1588 = vmax.f32 %v1586, %v1587
      %v1589 = vrot.slane %v1011, 4
      %v1590 = vmax.f32 %v1011, %v1589
      %v1591 = vrot.slane %v1590, 2
      %v1592 = vmax.f32 %v1590, %v1591
      %v1593 = vrot.slane %v1592, 1
      %v1594 = vmax.f32 %v1592, %v1593
      %v1595 = vrot.slane %v1014, 4
      %v1596 = vmax.f32 %v1014, %v1595
      %v1597 = vrot.slane %v1596, 2
      %v1598 = vmax.f32 %v1596, %v1597
      %v1599 = vrot.slane %v1598, 1
      %v1600 = vmax.f32 %v1598, %v1599
      %v1601 = vrot.slane %v1019, 4
      %v1602 = vmax.f32 %v1019, %v1601
      %v1603 = vrot.slane %v1602, 2
      %v1604 = vmax.f32 %v1602, %v1603
      %v1605 = vrot.slane %v1604, 1
      %v1606 = vmax.f32 %v1604, %v1605
      %v1607 = vrot.slane %v1022, 4
      %v1608 = vmax.f32 %v1022, %v1607
      %v1609 = vrot.slane %v1608, 2
      %v1610 = vmax.f32 %v1608, %v1609
      %v1611 = vrot.slane %v1610, 1
      %v1612 = vmax.f32 %v1610, %v1611
      %v1613 = vrot.slane %v1027, 4
      %v1614 = vmax.f32 %v1027, %v1613
      %v1615 = vrot.slane %v1614, 2
      %v1616 = vmax.f32 %v1614, %v1615
      %v1617 = vrot.slane %v1616, 1
      %v1618 = vmax.f32 %v1616, %v1617
      %v1619 = vrot.slane %v1030, 4
      %v1620 = vmax.f32 %v1030, %v1619
      %v1621 = vrot.slane %v1620, 2
      %v1622 = vmax.f32 %v1620, %v1621
      %v1623 = vrot.slane %v1622, 1
      %v1624 = vmax.f32 %v1622, %v1623
      %v1625 = vrot.slane %v1035, 4
      %v1626 = vmax.f32 %v1035, %v1625
      %v1627 = vrot.slane %v1626, 2
      %v1628 = vmax.f32 %v1626, %v1627
      %v1629 = vrot.slane %v1628, 1
      %v1630 = vmax.f32 %v1628, %v1629
      %v1631 = vrot.slane %v1038, 4
      %v1632 = vmax.f32 %v1038, %v1631
      %v1633 = vrot.slane %v1632, 2
      %v1634 = vmax.f32 %v1632, %v1633
      %v1635 = vrot.slane %v1634, 1
      %v1636 = vmax.f32 %v1634, %v1635
      %v1637 = vrot.slane %v1043, 4
      %v1638 = vmax.f32 %v1043, %v1637
      %v1639 = vrot.slane %v1638, 2
      %v1640 = vmax.f32 %v1638, %v1639
      %v1641 = vrot.slane %v1640, 1
      %v1642 = vmax.f32 %v1640, %v1641
      %v1643 = vrot.slane %v1046, 4
      %v1644 = vmax.f32 %v1046, %v1643
      %v1645 = vrot.slane %v1644, 2
      %v1646 = vmax.f32 %v1644, %v1645
      %v1647 = vrot.slane %v1646, 1
      %v1648 = vmax.f32 %v1646, %v1647
      %v1649 = vrot.slane %v1051, 4
      %v1650 = vmax.f32 %v1051, %v1649
      %v1651 = vrot.slane %v1650, 2
      %v1652 = vmax.f32 %v1650, %v1651
      %v1653 = vrot.slane %v1652, 1
      %v1654 = vmax.f32 %v1652, %v1653
      %v1655 = vrot.slane %v1054, 4
      %v1656 = vmax.f32 %v1054, %v1655
      %v1657 = vrot.slane %v1656, 2
      %v1658 = vmax.f32 %v1656, %v1657
      %v1659 = vrot.slane %v1658, 1
      %v1660 = vmax.f32 %v1658, %v1659
      %v1661 = vrot.slane %v1059, 4
      %v1662 = vmax.f32 %v1059, %v1661
      %v1663 = vrot.slane %v1662, 2
      %v1664 = vmax.f32 %v1662, %v1663
      %v1665 = vrot.slane %v1664, 1
      %v1666 = vmax.f32 %v1664, %v1665
      %v1667 = vrot.slane %v1062, 4
      %v1668 = vmax.f32 %v1062, %v1667
      %v1669 = vrot.slane %v1668, 2
      %v1670 = vmax.f32 %v1668, %v1669
      %v1671 = vrot.slane %v1670, 1
      %v1672 = vmax.f32 %v1670, %v1671
      %v1673 = vrot.slane %v1067, 4
      %v1674 = vmax.f32 %v1067, %v1673
      %v1675 = vrot.slane %v1674, 2
      %v1676 = vmax.f32 %v1674, %v1675
      %v1677 = vrot.slane %v1676, 1
      %v1678 = vmax.f32 %v1676, %v1677
      %v1679 = vrot.slane %v1070, 4
      %v1680 = vmax.f32 %v1070, %v1679
      %v1681 = vrot.slane %v1680, 2
      %v1682 = vmax.f32 %v1680, %v1681
      %v1683 = vrot.slane %v1682, 1
      %v1684 = vmax.f32 %v1682, %v1683
      %v1685 = vrot.slane %v1075, 4
      %v1686 = vmax.f32 %v1075, %v1685
      %v1687 = vrot.slane %v1686, 2
      %v1688 = vmax.f32 %v1686, %v1687
      %v1689 = vrot.slane %v1688, 1
      %v1690 = vmax.f32 %v1688, %v1689
      %v1691 = vrot.slane %v1078, 4
      %v1692 = vmax.f32 %v1078, %v1691
      %v1693 = vrot.slane %v1692, 2
      %v1694 = vmax.f32 %v1692, %v1693
      %v1695 = vrot.slane %v1694, 1
      %v1696 = vmax.f32 %v1694, %v1695
      %v1697 = vrot.slane %v1083, 4
      %v1698 = vmax.f32 %v1083, %v1697
      %v1699 = vrot.slane %v1698, 2
      %v1700 = vmax.f32 %v1698, %v1699
      %v1701 = vrot.slane %v1700, 1
      %v1702 = vmax.f32 %v1700, %v1701
      %v1703 = vrot.slane %v1086, 4
      %v1704 = vmax.f32 %v1086, %v1703
      %v1705 = vrot.slane %v1704, 2
      %v1706 = vmax.f32 %v1704, %v1705
      %v1707 = vrot.slane %v1706, 1
      %v1708 = vmax.f32 %v1706, %v1707
      %v1709 = vrot.slane %v1091, 4
      %v1710 = vmax.f32 %v1091, %v1709
      %v1711 = vrot.slane %v1710, 2
      %v1712 = vmax.f32 %v1710, %v1711
      %v1713 = vrot.slane %v1712, 1
      %v1714 = vmax.f32 %v1712, %v1713
      %v1715 = vrot.slane %v1094, 4
      %v1716 = vmax.f32 %v1094, %v1715
      %v1717 = vrot.slane %v1716, 2
      %v1718 = vmax.f32 %v1716, %v1717
      %v1719 = vrot.slane %v1718, 1
      %v1720 = vmax.f32 %v1718, %v1719
      %v1721 = vrot.slane %v1099, 4
      %v1722 = vmax.f32 %v1099, %v1721
      %v1723 = vrot.slane %v1722, 2
      %v1724 = vmax.f32 %v1722, %v1723
      %v1725 = vrot.slane %v1724, 1
      %v1726 = vmax.f32 %v1724, %v1725
      %v1727 = vrot.slane %v1102, 4
      %v1728 = vmax.f32 %v1102, %v1727
      %v1729 = vrot.slane %v1728, 2
      %v1730 = vmax.f32 %v1728, %v1729
      %v1731 = vrot.slane %v1730, 1
      %v1732 = vmax.f32 %v1730, %v1731
      %v1733 = vrot.slane %v1107, 4
      %v1734 = vmax.f32 %v1107, %v1733
      %v1735 = vrot.slane %v1734, 2
      %v1736 = vmax.f32 %v1734, %v1735
      %v1737 = vrot.slane %v1736, 1
      %v1738 = vmax.f32 %v1736, %v1737
      %v1739 = vrot.slane %v1110, 4
      %v1740 = vmax.f32 %v1110, %v1739
      %v1741 = vrot.slane %v1740, 2
      %v1742 = vmax.f32 %v1740, %v1741
      %v1743 = vrot.slane %v1742, 1
      %v1744 = vmax.f32 %v1742, %v1743
      %v1745 = vrot.slane %v1115, 4
      %v1746 = vmax.f32 %v1115, %v1745
      %v1747 = vrot.slane %v1746, 2
      %v1748 = vmax.f32 %v1746, %v1747
      %v1749 = vrot.slane %v1748, 1
      %v1750 = vmax.f32 %v1748, %v1749
      %v1751 = vrot.slane %v1118, 4
      %v1752 = vmax.f32 %v1118, %v1751
      %v1753 = vrot.slane %v1752, 2
      %v1754 = vmax.f32 %v1752, %v1753
      %v1755 = vrot.slane %v1754, 1
      %v1756 = vmax.f32 %v1754, %v1755
      %v1757 = vrot.slane %v1123, 4
      %v1758 = vmax.f32 %v1123, %v1757
      %v1759 = vrot.slane %v1758, 2
      %v1760 = vmax.f32 %v1758, %v1759
      %v1761 = vrot.slane %v1760, 1
      %v1762 = vmax.f32 %v1760, %v1761
      %v1763 = vrot.slane %v1126, 4
      %v1764 = vmax.f32 %v1126, %v1763
      %v1765 = vrot.slane %v1764, 2
      %v1766 = vmax.f32 %v1764, %v1765
      %v1767 = vrot.slane %v1766, 1
      %v1768 = vmax.f32 %v1766, %v1767
      %v1769 = vrot.slane %v1131, 4
      %v1770 = vmax.f32 %v1131, %v1769
      %v1771 = vrot.slane %v1770, 2
      %v1772 = vmax.f32 %v1770, %v1771
      %v1773 = vrot.slane %v1772, 1
      %v1774 = vmax.f32 %v1772, %v1773
      %v1775 = vrot.slane %v1134, 4
      %v1776 = vmax.f32 %v1134, %v1775
      %v1777 = vrot.slane %v1776, 2
      %v1778 = vmax.f32 %v1776, %v1777
      %v1779 = vrot.slane %v1778, 1
      %v1780 = vmax.f32 %v1778, %v1779
      %v1781 = vrot.slane %v1139, 4
      %v1782 = vmax.f32 %v1139, %v1781
      %v1783 = vrot.slane %v1782, 2
      %v1784 = vmax.f32 %v1782, %v1783
      %v1785 = vrot.slane %v1784, 1
      %v1786 = vmax.f32 %v1784, %v1785
      %v1787 = vrot.slane %v1142, 4
      %v1788 = vmax.f32 %v1142, %v1787
      %v1789 = vrot.slane %v1788, 2
      %v1790 = vmax.f32 %v1788, %v1789
      %v1791 = vrot.slane %v1790, 1
      %v1792 = vmax.f32 %v1790, %v1791
      %v1793 = vrot.slane %v1147, 4
      %v1794 = vmax.f32 %v1147, %v1793
      %v1795 = vrot.slane %v1794, 2
      %v1796 = vmax.f32 %v1794, %v1795
      %v1797 = vrot.slane %v1796, 1
      %v1798 = vmax.f32 %v1796, %v1797
      %v1799 = vrot.slane %v1150, 4
      %v1800 = vmax.f32 %v1150, %v1799
      %v1801 = vrot.slane %v1800, 2
      %v1802 = vmax.f32 %v1800, %v1801
      %v1803 = vrot.slane %v1802, 1
      %v1804 = vmax.f32 %v1802, %v1803
      %v1805 = vrot.slane %v1155, 4
      %v1806 = vmax.f32 %v1155, %v1805
      %v1807 = vrot.slane %v1806, 2
      %v1808 = vmax.f32 %v1806, %v1807
      %v1809 = vrot.slane %v1808, 1
      %v1810 = vmax.f32 %v1808, %v1809
      %v1811 = vrot.slane %v1158, 4
      %v1812 = vmax.f32 %v1158, %v1811
      %v1813 = vrot.slane %v1812, 2
      %v1814 = vmax.f32 %v1812, %v1813
      %v1815 = vrot.slane %v1814, 1
      %v1816 = vmax.f32 %v1814, %v1815
      %v1817 = vrot.slane %v1163, 4
      %v1818 = vmax.f32 %v1163, %v1817
      %v1819 = vrot.slane %v1818, 2
      %v1820 = vmax.f32 %v1818, %v1819
      %v1821 = vrot.slane %v1820, 1
      %v1822 = vmax.f32 %v1820, %v1821
      %v1823 = vrot.slane %v1166, 4
      %v1824 = vmax.f32 %v1166, %v1823
      %v1825 = vrot.slane %v1824, 2
      %v1826 = vmax.f32 %v1824, %v1825
      %v1827 = vrot.slane %v1826, 1
      %v1828 = vmax.f32 %v1826, %v1827
      %v1829 = vrot.slane %v1171, 4
      %v1830 = vmax.f32 %v1171, %v1829
      %v1831 = vrot.slane %v1830, 2
      %v1832 = vmax.f32 %v1830, %v1831
      %v1833 = vrot.slane %v1832, 1
      %v1834 = vmax.f32 %v1832, %v1833
      %v1835 = vrot.slane %v1174, 4
      %v1836 = vmax.f32 %v1174, %v1835
      %v1837 = vrot.slane %v1836, 2
      %v1838 = vmax.f32 %v1836, %v1837
      %v1839 = vrot.slane %v1838, 1
      %v1840 = vmax.f32 %v1838, %v1839
      %v1841 = vrot.slane %v1179, 4
      %v1842 = vmax.f32 %v1179, %v1841
      %v1843 = vrot.slane %v1842, 2
      %v1844 = vmax.f32 %v1842, %v1843
      %v1845 = vrot.slane %v1844, 1
      %v1846 = vmax.f32 %v1844, %v1845
      %v1847 = vrot.slane %v1182, 4
      %v1848 = vmax.f32 %v1182, %v1847
      %v1849 = vrot.slane %v1848, 2
      %v1850 = vmax.f32 %v1848, %v1849
      %v1851 = vrot.slane %v1850, 1
      %v1852 = vmax.f32 %v1850, %v1851
      %v1853 = vrot.slane %v1187, 4
      %v1854 = vmax.f32 %v1187, %v1853
      %v1855 = vrot.slane %v1854, 2
      %v1856 = vmax.f32 %v1854, %v1855
      %v1857 = vrot.slane %v1856, 1
      %v1858 = vmax.f32 %v1856, %v1857
      %v1859 = vrot.slane %v1190, 4
      %v1860 = vmax.f32 %v1190, %v1859
      %v1861 = vrot.slane %v1860, 2
      %v1862 = vmax.f32 %v1860, %v1861
      %v1863 = vrot.slane %v1862, 1
      %v1864 = vmax.f32 %v1862, %v1863
      %v1865 = vrot.slane %v1195, 4
      %v1866 = vmax.f32 %v1195, %v1865
      %v1867 = vrot.slane %v1866, 2
      %v1868 = vmax.f32 %v1866, %v1867
      %v1869 = vrot.slane %v1868, 1
      %v1870 = vmax.f32 %v1868, %v1869
      %v1871 = vrot.slane %v1198, 4
      %v1872 = vmax.f32 %v1198, %v1871
      %v1873 = vrot.slane %v1872, 2
      %v1874 = vmax.f32 %v1872, %v1873
      %v1875 = vrot.slane %v1874, 1
      %v1876 = vmax.f32 %v1874, %v1875
      %v1877 = vrot.slane %v1203, 4
      %v1878 = vmax.f32 %v1203, %v1877
      %v1879 = vrot.slane %v1878, 2
      %v1880 = vmax.f32 %v1878, %v1879
      %v1881 = vrot.slane %v1880, 1
      %v1882 = vmax.f32 %v1880, %v1881
      %v1883 = vrot.slane %v1206, 4
      %v1884 = vmax.f32 %v1206, %v1883
      %v1885 = vrot.slane %v1884, 2
      %v1886 = vmax.f32 %v1884, %v1885
      %v1887 = vrot.slane %v1886, 1
      %v1888 = vmax.f32 %v1886, %v1887
      %v1889 = vrot.slane %v1211, 4
      %v1890 = vmax.f32 %v1211, %v1889
      %v1891 = vrot.slane %v1890, 2
      %v1892 = vmax.f32 %v1890, %v1891
      %v1893 = vrot.slane %v1892, 1
      %v1894 = vmax.f32 %v1892, %v1893
      %v1895 = vrot.slane %v1214, 4
      %v1896 = vmax.f32 %v1214, %v1895
      %v1897 = vrot.slane %v1896, 2
      %v1898 = vmax.f32 %v1896, %v1897
      %v1899 = vrot.slane %v1898, 1
      %v1900 = vmax.f32 %v1898, %v1899
      %v1901 = vrot.slane %v1219, 4
      %v1902 = vmax.f32 %v1219, %v1901
      %v1903 = vrot.slane %v1902, 2
      %v1904 = vmax.f32 %v1902, %v1903
      %v1905 = vrot.slane %v1904, 1
      %v1906 = vmax.f32 %v1904, %v1905
      %v1907 = vrot.slane %v1222, 4
      %v1908 = vmax.f32 %v1222, %v1907
      %v1909 = vrot.slane %v1908, 2
      %v1910 = vmax.f32 %v1908, %v1909
      %v1911 = vrot.slane %v1910, 1
      %v1912 = vmax.f32 %v1910, %v1911
      %v1913 = vrot.slane %v1227, 4
      %v1914 = vmax.f32 %v1227, %v1913
      %v1915 = vrot.slane %v1914, 2
      %v1916 = vmax.f32 %v1914, %v1915
      %v1917 = vrot.slane %v1916, 1
      %v1918 = vmax.f32 %v1916, %v1917
      %v1919 = vrot.slane %v1230, 4
      %v1920 = vmax.f32 %v1230, %v1919
      %v1921 = vrot.slane %v1920, 2
      %v1922 = vmax.f32 %v1920, %v1921
      %v1923 = vrot.slane %v1922, 1
      %v1924 = vmax.f32 %v1922, %v1923
      %v1925 = vrot.slane %v1235, 4
      %v1926 = vmax.f32 %v1235, %v1925
      %v1927 = vrot.slane %v1926, 2
      %v1928 = vmax.f32 %v1926, %v1927
      %v1929 = vrot.slane %v1928, 1
      %v1930 = vmax.f32 %v1928, %v1929
      %v1931 = vrot.slane %v1238, 4
      %v1932 = vmax.f32 %v1238, %v1931
      %v1933 = vrot.slane %v1932, 2
      %v1934 = vmax.f32 %v1932, %v1933
      %v1935 = vrot.slane %v1934, 1
      %v1936 = vmax.f32 %v1934, %v1935
      %v1937 = vrot.slane %v1243, 4
      %v1938 = vmax.f32 %v1243, %v1937
      %v1939 = vrot.slane %v1938, 2
      %v1940 = vmax.f32 %v1938, %v1939
      %v1941 = vrot.slane %v1940, 1
      %v1942 = vmax.f32 %v1940, %v1941
      %v1943 = vrot.slane %v1246, 4
      %v1944 = vmax.f32 %v1246, %v1943
      %v1945 = vrot.slane %v1944, 2
      %v1946 = vmax.f32 %v1944, %v1945
      %v1947 = vrot.slane %v1946, 1
      %v1948 = vmax.f32 %v1946, %v1947
      %v1949 = vrot.slane %v1251, 4
      %v1950 = vmax.f32 %v1251, %v1949
      %v1951 = vrot.slane %v1950, 2
      %v1952 = vmax.f32 %v1950, %v1951
      %v1953 = vrot.slane %v1952, 1
      %v1954 = vmax.f32 %v1952, %v1953
      %v1955 = vrot.slane %v1254, 4
      %v1956 = vmax.f32 %v1254, %v1955
      %v1957 = vrot.slane %v1956, 2
      %v1958 = vmax.f32 %v1956, %v1957
      %v1959 = vrot.slane %v1958, 1
      %v1960 = vmax.f32 %v1958, %v1959
      %v1961 = vrot.slane %v1259, 4
      %v1962 = vmax.f32 %v1259, %v1961
      %v1963 = vrot.slane %v1962, 2
      %v1964 = vmax.f32 %v1962, %v1963
      %v1965 = vrot.slane %v1964, 1
      %v1966 = vmax.f32 %v1964, %v1965
      %v1967 = vrot.slane %v1262, 4
      %v1968 = vmax.f32 %v1262, %v1967
      %v1969 = vrot.slane %v1968, 2
      %v1970 = vmax.f32 %v1968, %v1969
      %v1971 = vrot.slane %v1970, 1
      %v1972 = vmax.f32 %v1970, %v1971
      %v1973 = vrot.slane %v1267, 4
      %v1974 = vmax.f32 %v1267, %v1973
      %v1975 = vrot.slane %v1974, 2
      %v1976 = vmax.f32 %v1974, %v1975
      %v1977 = vrot.slane %v1976, 1
      %v1978 = vmax.f32 %v1976, %v1977
      %v1979 = vrot.slane %v1270, 4
      %v1980 = vmax.f32 %v1270, %v1979
      %v1981 = vrot.slane %v1980, 2
      %v1982 = vmax.f32 %v1980, %v1981
      %v1983 = vrot.slane %v1982, 1
      %v1984 = vmax.f32 %v1982, %v1983
      %v1985 = vrot.slane %v1275, 4
      %v1986 = vmax.f32 %v1275, %v1985
      %v1987 = vrot.slane %v1986, 2
      %v1988 = vmax.f32 %v1986, %v1987
      %v1989 = vrot.slane %v1988, 1
      %v1990 = vmax.f32 %v1988, %v1989
      %v1991 = vrot.slane %v1278, 4
      %v1992 = vmax.f32 %v1278, %v1991
      %v1993 = vrot.slane %v1992, 2
      %v1994 = vmax.f32 %v1992, %v1993
      %v1995 = vrot.slane %v1994, 1
      %v1996 = vmax.f32 %v1994, %v1995
      %v1997 = vrot.slane %v1283, 4
      %v1998 = vmax.f32 %v1283, %v1997
      %v1999 = vrot.slane %v1998, 2
      %v2000 = vmax.f32 %v1998, %v1999
      %v2001 = vrot.slane %v2000, 1
      %v2002 = vmax.f32 %v2000, %v2001
      %v2003 = vrot.slane %v1286, 4
      %v2004 = vmax.f32 %v1286, %v2003
      %v2005 = vrot.slane %v2004, 2
      %v2006 = vmax.f32 %v2004, %v2005
      %v2007 = vrot.slane %v2006, 1
      %v2008 = vmax.f32 %v2006, %v2007
      %v2009 = vrot.slane %v1291, 4
      %v2010 = vmax.f32 %v1291, %v2009
      %v2011 = vrot.slane %v2010, 2
      %v2012 = vmax.f32 %v2010, %v2011
      %v2013 = vrot.slane %v2012, 1
      %v2014 = vmax.f32 %v2012, %v2013
      %v2015 = vrot.slane %v1294, 4
      %v2016 = vmax.f32 %v1294, %v2015
      %v2017 = vrot.slane %v2016, 2
      %v2018 = vmax.f32 %v2016, %v2017
      %v2019 = vrot.slane %v2018, 1
      %v2020 = vmax.f32 %v2018, %v2019
      %v2021 = vrot.slane %v1299, 4
      %v2022 = vmax.f32 %v1299, %v2021
      %v2023 = vrot.slane %v2022, 2
      %v2024 = vmax.f32 %v2022, %v2023
      %v2025 = vrot.slane %v2024, 1
      %v2026 = vmax.f32 %v2024, %v2025
      %v2027 = vrot.slane %v1302, 4
      %v2028 = vmax.f32 %v1302, %v2027
      %v2029 = vrot.slane %v2028, 2
      %v2030 = vmax.f32 %v2028, %v2029
      %v2031 = vrot.slane %v2030, 1
      %v2032 = vmax.f32 %v2030, %v2031
      %v2033 = vrot.slane %v1307, 4
      %v2034 = vmax.f32 %v1307, %v2033
      %v2035 = vrot.slane %v2034, 2
      %v2036 = vmax.f32 %v2034, %v2035
      %v2037 = vrot.slane %v2036, 1
      %v2038 = vmax.f32 %v2036, %v2037
      %v2039 = vrot.slane %v1310, 4
      %v2040 = vmax.f32 %v1310, %v2039
      %v2041 = vrot.slane %v2040, 2
      %v2042 = vmax.f32 %v2040, %v2041
      %v2043 = vrot.slane %v2042, 1
      %v2044 = vmax.f32 %v2042, %v2043
      %v2045 = vrot.slane %v1315, 4
      %v2046 = vmax.f32 %v1315, %v2045
      %v2047 = vrot.slane %v2046, 2
      %v2048 = vmax.f32 %v2046, %v2047
      %v2049 = vrot.slane %v2048, 1
      %v2050 = vmax.f32 %v2048, %v2049
      %v2051 = vrot.slane %v1318, 4
      %v2052 = vmax.f32 %v1318, %v2051
      %v2053 = vrot.slane %v2052, 2
      %v2054 = vmax.f32 %v2052, %v2053
      %v2055 = vrot.slane %v2054, 1
      %v2056 = vmax.f32 %v2054, %v2055
      %v2057 = vrot.slane %v1323, 4
      %v2058 = vmax.f32 %v1323, %v2057
      %v2059 = vrot.slane %v2058, 2
      %v2060 = vmax.f32 %v2058, %v2059
      %v2061 = vrot.slane %v2060, 1
      %v2062 = vmax.f32 %v2060, %v2061
      %v2063 = vrot.slane %v1326, 4
      %v2064 = vmax.f32 %v1326, %v2063
      %v2065 = vrot.slane %v2064, 2
      %v2066 = vmax.f32 %v2064, %v2065
      %v2067 = vrot.slane %v2066, 1
      %v2068 = vmax.f32 %v2066, %v2067
      %v2069 = vrot.slane %v1331, 4
      %v2070 = vmax.f32 %v1331, %v2069
      %v2071 = vrot.slane %v2070, 2
      %v2072 = vmax.f32 %v2070, %v2071
      %v2073 = vrot.slane %v2072, 1
      %v2074 = vmax.f32 %v2072, %v2073
      %v2075 = vrot.slane %v1334, 4
      %v2076 = vmax.f32 %v1334, %v2075
      %v2077 = vrot.slane %v2076, 2
      %v2078 = vmax.f32 %v2076, %v2077
      %v2079 = vrot.slane %v2078, 1
      %v2080 = vmax.f32 %v2078, %v2079
      %v2081 = vrot.slane %v1339, 4
      %v2082 = vmax.f32 %v1339, %v2081
      %v2083 = vrot.slane %v2082, 2
      %v2084 = vmax.f32 %v2082, %v2083
      %v2085 = vrot.slane %v2084, 1
      %v2086 = vmax.f32 %v2084, %v2085
      %v2087 = vrot.slane %v1342, 4
      %v2088 = vmax.f32 %v1342, %v2087
      %v2089 = vrot.slane %v2088, 2
      %v2090 = vmax.f32 %v2088, %v2089
      %v2091 = vrot.slane %v2090, 1
      %v2092 = vmax.f32 %v2090, %v2091
      %v2093 = vrot.slane %v1347, 4
      %v2094 = vmax.f32 %v1347, %v2093
      %v2095 = vrot.slane %v2094, 2
      %v2096 = vmax.f32 %v2094, %v2095
      %v2097 = vrot.slane %v2096, 1
      %v2098 = vmax.f32 %v2096, %v2097
      %v2099 = vrot.slane %v1350, 4
      %v2100 = vmax.f32 %v1350, %v2099
      %v2101 = vrot.slane %v2100, 2
      %v2102 = vmax.f32 %v2100, %v2101
      %v2103 = vrot.slane %v2102, 1
      %v2104 = vmax.f32 %v2102, %v2103
      %v2105 = vrot.slane %v1355, 4
      %v2106 = vmax.f32 %v1355, %v2105
      %v2107 = vrot.slane %v2106, 2
      %v2108 = vmax.f32 %v2106, %v2107
      %v2109 = vrot.slane %v2108, 1
      %v2110 = vmax.f32 %v2108, %v2109
      %v2111 = vrot.slane %v1358, 4
      %v2112 = vmax.f32 %v1358, %v2111
      %v2113 = vrot.slane %v2112, 2
      %v2114 = vmax.f32 %v2112, %v2113
      %v2115 = vrot.slane %v2114, 1
      %v2116 = vmax.f32 %v2114, %v2115
      %v2117 = vrot.slane %v1363, 4
      %v2118 = vmax.f32 %v1363, %v2117
      %v2119 = vrot.slane %v2118, 2
      %v2120 = vmax.f32 %v2118, %v2119
      %v2121 = vrot.slane %v2120, 1
      %v2122 = vmax.f32 %v2120, %v2121
      %v2123 = vrot.slane %v1366, 4
      %v2124 = vmax.f32 %v1366, %v2123
      %v2125 = vrot.slane %v2124, 2
      %v2126 = vmax.f32 %v2124, %v2125
      %v2127 = vrot.slane %v2126, 1
      %v2128 = vmax.f32 %v2126, %v2127
      %v2129 = vrot.slane %v1371, 4
      %v2130 = vmax.f32 %v1371, %v2129
      %v2131 = vrot.slane %v2130, 2
      %v2132 = vmax.f32 %v2130, %v2131
      %v2133 = vrot.slane %v2132, 1
      %v2134 = vmax.f32 %v2132, %v2133
      %v2135 = vrot.slane %v1374, 4
      %v2136 = vmax.f32 %v1374, %v2135
      %v2137 = vrot.slane %v2136, 2
      %v2138 = vmax.f32 %v2136, %v2137
      %v2139 = vrot.slane %v2138, 1
      %v2140 = vmax.f32 %v2138, %v2139
      %v2141 = vrot.slane %v1379, 4
      %v2142 = vmax.f32 %v1379, %v2141
      %v2143 = vrot.slane %v2142, 2
      %v2144 = vmax.f32 %v2142, %v2143
      %v2145 = vrot.slane %v2144, 1
      %v2146 = vmax.f32 %v2144, %v2145
      %v2147 = vrot.slane %v1382, 4
      %v2148 = vmax.f32 %v1382, %v2147
      %v2149 = vrot.slane %v2148, 2
      %v2150 = vmax.f32 %v2148, %v2149
      %v2151 = vrot.slane %v2150, 1
      %v2152 = vmax.f32 %v2150, %v2151
      %v2153 = vld [vmem:[%s2] sm:$0x1]
      %v2155 = vlaneseq
      %v2156 = vshrl.u32 %v2155, 7
      %v2157 = vsub.s32 0, %v2156
      %v2158 = vrot.slane %v2153, %v2157
      %v2160 = vadd.f32 %v1390, %v2158
      %v2161 = vadd.f32 %v1396, %v2158
      %v2162 = vadd.f32 %v1402, %v2158
      %v2163 = vadd.f32 %v1408, %v2158
      %v2164 = vadd.f32 %v1414, %v2158
      %v2165 = vadd.f32 %v1420, %v2158
      %v2166 = vadd.f32 %v1426, %v2158
      %v2167 = vadd.f32 %v1432, %v2158
      %v2168 = vadd.f32 %v1438, %v2158
      %v2169 = vadd.f32 %v1444, %v2158
      %v2170 = vadd.f32 %v1450, %v2158
      %v2171 = vadd.f32 %v1456, %v2158
      %v2172 = vadd.f32 %v1462, %v2158
      %v2173 = vadd.f32 %v1468, %v2158
      %v2174 = vadd.f32 %v1474, %v2158
      %v2175 = vadd.f32 %v1480, %v2158
      %v2176 = vadd.f32 %v1486, %v2158
      %v2177 = vadd.f32 %v1492, %v2158
      %v2178 = vadd.f32 %v1498, %v2158
      %v2179 = vadd.f32 %v1504, %v2158
      %v2180 = vadd.f32 %v1510, %v2158
      %v2181 = vadd.f32 %v1516, %v2158
      %v2182 = vadd.f32 %v1522, %v2158
      %v2183 = vadd.f32 %v1528, %v2158
      %v2184 = vadd.f32 %v1534, %v2158
      %v2185 = vadd.f32 %v1540, %v2158
      %v2186 = vadd.f32 %v1546, %v2158
      %v2187 = vadd.f32 %v1552, %v2158
      %v2188 = vadd.f32 %v1558, %v2158
      %v2189 = vadd.f32 %v1564, %v2158
      %v2190 = vadd.f32 %v1570, %v2158
      %v2191 = vadd.f32 %v1576, %v2158
      %v2192 = vadd.f32 %v1582, %v2158
      %v2193 = vadd.f32 %v1588, %v2158
      %v2194 = vadd.f32 %v1594, %v2158
      %v2195 = vadd.f32 %v1600, %v2158
      %v2196 = vadd.f32 %v1606, %v2158
      %v2197 = vadd.f32 %v1612, %v2158
      %v2198 = vadd.f32 %v1618, %v2158
      %v2199 = vadd.f32 %v1624, %v2158
      %v2200 = vadd.f32 %v1630, %v2158
      %v2201 = vadd.f32 %v1636, %v2158
      %v2202 = vadd.f32 %v1642, %v2158
      %v2203 = vadd.f32 %v1648, %v2158
      %v2204 = vadd.f32 %v1654, %v2158
      %v2205 = vadd.f32 %v1660, %v2158
      %v2206 = vadd.f32 %v1666, %v2158
      %v2207 = vadd.f32 %v1672, %v2158
      %v2208 = vadd.f32 %v1678, %v2158
      %v2209 = vadd.f32 %v1684, %v2158
      %v2210 = vadd.f32 %v1690, %v2158
      %v2211 = vadd.f32 %v1696, %v2158
      %v2212 = vadd.f32 %v1702, %v2158
      %v2213 = vadd.f32 %v1708, %v2158
      %v2214 = vadd.f32 %v1714, %v2158
      %v2215 = vadd.f32 %v1720, %v2158
      %v2216 = vadd.f32 %v1726, %v2158
      %v2217 = vadd.f32 %v1732, %v2158
      %v2218 = vadd.f32 %v1738, %v2158
      %v2219 = vadd.f32 %v1744, %v2158
      %v2220 = vadd.f32 %v1750, %v2158
      %v2221 = vadd.f32 %v1756, %v2158
      %v2222 = vadd.f32 %v1762, %v2158
      %v2223 = vadd.f32 %v1768, %v2158
      %v2224 = vadd.f32 %v1774, %v2158
      %v2225 = vadd.f32 %v1780, %v2158
      %v2226 = vadd.f32 %v1786, %v2158
      %v2227 = vadd.f32 %v1792, %v2158
      %v2228 = vadd.f32 %v1798, %v2158
      %v2229 = vadd.f32 %v1804, %v2158
      %v2230 = vadd.f32 %v1810, %v2158
      %v2231 = vadd.f32 %v1816, %v2158
      %v2232 = vadd.f32 %v1822, %v2158
      %v2233 = vadd.f32 %v1828, %v2158
      %v2234 = vadd.f32 %v1834, %v2158
      %v2235 = vadd.f32 %v1840, %v2158
      %v2236 = vadd.f32 %v1846, %v2158
      %v2237 = vadd.f32 %v1852, %v2158
      %v2238 = vadd.f32 %v1858, %v2158
      %v2239 = vadd.f32 %v1864, %v2158
      %v2240 = vadd.f32 %v1870, %v2158
      %v2241 = vadd.f32 %v1876, %v2158
      %v2242 = vadd.f32 %v1882, %v2158
      %v2243 = vadd.f32 %v1888, %v2158
      %v2244 = vadd.f32 %v1894, %v2158
      %v2245 = vadd.f32 %v1900, %v2158
      %v2246 = vadd.f32 %v1906, %v2158
      %v2247 = vadd.f32 %v1912, %v2158
      %v2248 = vadd.f32 %v1918, %v2158
      %v2249 = vadd.f32 %v1924, %v2158
      %v2250 = vadd.f32 %v1930, %v2158
      %v2251 = vadd.f32 %v1936, %v2158
      %v2252 = vadd.f32 %v1942, %v2158
      %v2253 = vadd.f32 %v1948, %v2158
      %v2254 = vadd.f32 %v1954, %v2158
      %v2255 = vadd.f32 %v1960, %v2158
      %v2256 = vadd.f32 %v1966, %v2158
      %v2257 = vadd.f32 %v1972, %v2158
      %v2258 = vadd.f32 %v1978, %v2158
      %v2259 = vadd.f32 %v1984, %v2158
      %v2260 = vadd.f32 %v1990, %v2158
      %v2261 = vadd.f32 %v1996, %v2158
      %v2262 = vadd.f32 %v2002, %v2158
      %v2263 = vadd.f32 %v2008, %v2158
      %v2264 = vadd.f32 %v2014, %v2158
      %v2265 = vadd.f32 %v2020, %v2158
      %v2266 = vadd.f32 %v2026, %v2158
      %v2267 = vadd.f32 %v2032, %v2158
      %v2268 = vadd.f32 %v2038, %v2158
      %v2269 = vadd.f32 %v2044, %v2158
      %v2270 = vadd.f32 %v2050, %v2158
      %v2271 = vadd.f32 %v2056, %v2158
      %v2272 = vadd.f32 %v2062, %v2158
      %v2273 = vadd.f32 %v2068, %v2158
      %v2274 = vadd.f32 %v2074, %v2158
      %v2275 = vadd.f32 %v2080, %v2158
      %v2276 = vadd.f32 %v2086, %v2158
      %v2277 = vadd.f32 %v2092, %v2158
      %v2278 = vadd.f32 %v2098, %v2158
      %v2279 = vadd.f32 %v2104, %v2158
      %v2280 = vadd.f32 %v2110, %v2158
      %v2281 = vadd.f32 %v2116, %v2158
      %v2282 = vadd.f32 %v2122, %v2158
      %v2283 = vadd.f32 %v2128, %v2158
      %v2284 = vadd.f32 %v2134, %v2158
      %v2285 = vadd.f32 %v2140, %v2158
      %v2286 = vadd.f32 %v2146, %v2158
      %v2287 = vadd.f32 %v2152, %v2158
      %v2288 = vmax.f32 %v2160, 0.0
      %v2289 = vmax.f32 %v2161, 0.0
      %v2290 = vmax.f32 %v2162, 0.0
      %v2291 = vmax.f32 %v2163, 0.0
      %v2292 = vmax.f32 %v2164, 0.0
      %v2293 = vmax.f32 %v2165, 0.0
      %v2294 = vmax.f32 %v2166, 0.0
      %v2295 = vmax.f32 %v2167, 0.0
      %v2296 = vmax.f32 %v2168, 0.0
      %v2297 = vmax.f32 %v2169, 0.0
      %v2298 = vmax.f32 %v2170, 0.0
      %v2299 = vmax.f32 %v2171, 0.0
      %v2300 = vmax.f32 %v2172, 0.0
      %v2301 = vmax.f32 %v2173, 0.0
      %v2302 = vmax.f32 %v2174, 0.0
      %v2303 = vmax.f32 %v2175, 0.0
      %v2304 = vmax.f32 %v2176, 0.0
      %v2305 = vmax.f32 %v2177, 0.0
      %v2306 = vmax.f32 %v2178, 0.0
      %v2307 = vmax.f32 %v2179, 0.0
      %v2308 = vmax.f32 %v2180, 0.0
      %v2309 = vmax.f32 %v2181, 0.0
      %v2310 = vmax.f32 %v2182, 0.0
      %v2311 = vmax.f32 %v2183, 0.0
      %v2312 = vmax.f32 %v2184, 0.0
      %v2313 = vmax.f32 %v2185, 0.0
      %v2314 = vmax.f32 %v2186, 0.0
      %v2315 = vmax.f32 %v2187, 0.0
      %v2316 = vmax.f32 %v2188, 0.0
      %v2317 = vmax.f32 %v2189, 0.0
      %v2318 = vmax.f32 %v2190, 0.0
      %v2319 = vmax.f32 %v2191, 0.0
      %v2320 = vmax.f32 %v2192, 0.0
      %v2321 = vmax.f32 %v2193, 0.0
      %v2322 = vmax.f32 %v2194, 0.0
      %v2323 = vmax.f32 %v2195, 0.0
      %v2324 = vmax.f32 %v2196, 0.0
      %v2325 = vmax.f32 %v2197, 0.0
      %v2326 = vmax.f32 %v2198, 0.0
      %v2327 = vmax.f32 %v2199, 0.0
      %v2328 = vmax.f32 %v2200, 0.0
      %v2329 = vmax.f32 %v2201, 0.0
      %v2330 = vmax.f32 %v2202, 0.0
      %v2331 = vmax.f32 %v2203, 0.0
      %v2332 = vmax.f32 %v2204, 0.0
      %v2333 = vmax.f32 %v2205, 0.0
      %v2334 = vmax.f32 %v2206, 0.0
      %v2335 = vmax.f32 %v2207, 0.0
      %v2336 = vmax.f32 %v2208, 0.0
      %v2337 = vmax.f32 %v2209, 0.0
      %v2338 = vmax.f32 %v2210, 0.0
      %v2339 = vmax.f32 %v2211, 0.0
      %v2340 = vmax.f32 %v2212, 0.0
      %v2341 = vmax.f32 %v2213, 0.0
      %v2342 = vmax.f32 %v2214, 0.0
      %v2343 = vmax.f32 %v2215, 0.0
      %v2344 = vmax.f32 %v2216, 0.0
      %v2345 = vmax.f32 %v2217, 0.0
      %v2346 = vmax.f32 %v2218, 0.0
      %v2347 = vmax.f32 %v2219, 0.0
      %v2348 = vmax.f32 %v2220, 0.0
      %v2349 = vmax.f32 %v2221, 0.0
      %v2350 = vmax.f32 %v2222, 0.0
      %v2351 = vmax.f32 %v2223, 0.0
      %v2352 = vmax.f32 %v2224, 0.0
      %v2353 = vmax.f32 %v2225, 0.0
      %v2354 = vmax.f32 %v2226, 0.0
      %v2355 = vmax.f32 %v2227, 0.0
      %v2356 = vmax.f32 %v2228, 0.0
      %v2357 = vmax.f32 %v2229, 0.0
      %v2358 = vmax.f32 %v2230, 0.0
      %v2359 = vmax.f32 %v2231, 0.0
      %v2360 = vmax.f32 %v2232, 0.0
      %v2361 = vmax.f32 %v2233, 0.0
      %v2362 = vmax.f32 %v2234, 0.0
      %v2363 = vmax.f32 %v2235, 0.0
      %v2364 = vmax.f32 %v2236, 0.0
      %v2365 = vmax.f32 %v2237, 0.0
      %v2366 = vmax.f32 %v2238, 0.0
      %v2367 = vmax.f32 %v2239, 0.0
      %v2368 = vmax.f32 %v2240, 0.0
      %v2369 = vmax.f32 %v2241, 0.0
      %v2370 = vmax.f32 %v2242, 0.0
      %v2371 = vmax.f32 %v2243, 0.0
      %v2372 = vmax.f32 %v2244, 0.0
      %v2373 = vmax.f32 %v2245, 0.0
      %v2374 = vmax.f32 %v2246, 0.0
      %v2375 = vmax.f32 %v2247, 0.0
      %v2376 = vmax.f32 %v2248, 0.0
      %v2377 = vmax.f32 %v2249, 0.0
      %v2378 = vmax.f32 %v2250, 0.0
      %v2379 = vmax.f32 %v2251, 0.0
      %v2380 = vmax.f32 %v2252, 0.0
      %v2381 = vmax.f32 %v2253, 0.0
      %v2382 = vmax.f32 %v2254, 0.0
      %v2383 = vmax.f32 %v2255, 0.0
      %v2384 = vmax.f32 %v2256, 0.0
      %v2385 = vmax.f32 %v2257, 0.0
      %v2386 = vmax.f32 %v2258, 0.0
      %v2387 = vmax.f32 %v2259, 0.0
      %v2388 = vmax.f32 %v2260, 0.0
      %v2389 = vmax.f32 %v2261, 0.0
      %v2390 = vmax.f32 %v2262, 0.0
      %v2391 = vmax.f32 %v2263, 0.0
      %v2392 = vmax.f32 %v2264, 0.0
      %v2393 = vmax.f32 %v2265, 0.0
      %v2394 = vmax.f32 %v2266, 0.0
      %v2395 = vmax.f32 %v2267, 0.0
      %v2396 = vmax.f32 %v2268, 0.0
      %v2397 = vmax.f32 %v2269, 0.0
      %v2398 = vmax.f32 %v2270, 0.0
      %v2399 = vmax.f32 %v2271, 0.0
      %v2400 = vmax.f32 %v2272, 0.0
      %v2401 = vmax.f32 %v2273, 0.0
      %v2402 = vmax.f32 %v2274, 0.0
      %v2403 = vmax.f32 %v2275, 0.0
      %v2404 = vmax.f32 %v2276, 0.0
      %v2405 = vmax.f32 %v2277, 0.0
      %v2406 = vmax.f32 %v2278, 0.0
      %v2407 = vmax.f32 %v2279, 0.0
      %v2408 = vmax.f32 %v2280, 0.0
      %v2409 = vmax.f32 %v2281, 0.0
      %v2410 = vmax.f32 %v2282, 0.0
      %v2411 = vmax.f32 %v2283, 0.0
      %v2412 = vmax.f32 %v2284, 0.0
      %v2413 = vmax.f32 %v2285, 0.0
      %v2414 = vmax.f32 %v2286, 0.0
      %v2415 = vmax.f32 %v2287, 0.0
      %v2416 = vpack.c.bf16 %v2288, %v2288
      %v2417 = vpack.c.bf16 %v2289, %v2289
      %v2418 = vpack.c.bf16 %v2290, %v2290
      %v2419 = vpack.c.bf16 %v2291, %v2291
      %v2420 = vpack.c.bf16 %v2292, %v2292
      %v2421 = vpack.c.bf16 %v2293, %v2293
      %v2422 = vpack.c.bf16 %v2294, %v2294
      %v2423 = vpack.c.bf16 %v2295, %v2295
      %v2424 = vpack.c.bf16 %v2296, %v2296
      %v2425 = vpack.c.bf16 %v2297, %v2297
      %v2426 = vpack.c.bf16 %v2298, %v2298
      %v2427 = vpack.c.bf16 %v2299, %v2299
      %v2428 = vpack.c.bf16 %v2300, %v2300
      %v2429 = vpack.c.bf16 %v2301, %v2301
      %v2430 = vpack.c.bf16 %v2302, %v2302
      %v2431 = vpack.c.bf16 %v2303, %v2303
      %v2432 = vpack.c.bf16 %v2304, %v2304
      %v2433 = vpack.c.bf16 %v2305, %v2305
      %v2434 = vpack.c.bf16 %v2306, %v2306
      %v2435 = vpack.c.bf16 %v2307, %v2307
      %v2436 = vpack.c.bf16 %v2308, %v2308
      %v2437 = vpack.c.bf16 %v2309, %v2309
      %v2438 = vpack.c.bf16 %v2310, %v2310
      %v2439 = vpack.c.bf16 %v2311, %v2311
      %v2440 = vpack.c.bf16 %v2312, %v2312
      %v2441 = vpack.c.bf16 %v2313, %v2313
      %v2442 = vpack.c.bf16 %v2314, %v2314
      %v2443 = vpack.c.bf16 %v2315, %v2315
      %v2444 = vpack.c.bf16 %v2316, %v2316
      %v2445 = vpack.c.bf16 %v2317, %v2317
      %v2446 = vpack.c.bf16 %v2318, %v2318
      %v2447 = vpack.c.bf16 %v2319, %v2319
      %v2448 = vpack.c.bf16 %v2320, %v2320
      %v2449 = vpack.c.bf16 %v2321, %v2321
      %v2450 = vpack.c.bf16 %v2322, %v2322
      %v2451 = vpack.c.bf16 %v2323, %v2323
      %v2452 = vpack.c.bf16 %v2324, %v2324
      %v2453 = vpack.c.bf16 %v2325, %v2325
      %v2454 = vpack.c.bf16 %v2326, %v2326
      %v2455 = vpack.c.bf16 %v2327, %v2327
      %v2456 = vpack.c.bf16 %v2328, %v2328
      %v2457 = vpack.c.bf16 %v2329, %v2329
      %v2458 = vpack.c.bf16 %v2330, %v2330
      %v2459 = vpack.c.bf16 %v2331, %v2331
      %v2460 = vpack.c.bf16 %v2332, %v2332
      %v2461 = vpack.c.bf16 %v2333, %v2333
      %v2462 = vpack.c.bf16 %v2334, %v2334
      %v2463 = vpack.c.bf16 %v2335, %v2335
      %v2464 = vpack.c.bf16 %v2336, %v2336
      %v2465 = vpack.c.bf16 %v2337, %v2337
      %v2466 = vpack.c.bf16 %v2338, %v2338
      %v2467 = vpack.c.bf16 %v2339, %v2339
      %v2468 = vpack.c.bf16 %v2340, %v2340
      %v2469 = vpack.c.bf16 %v2341, %v2341
      %v2470 = vpack.c.bf16 %v2342, %v2342
      %v2471 = vpack.c.bf16 %v2343, %v2343
      %v2472 = vpack.c.bf16 %v2344, %v2344
      %v2473 = vpack.c.bf16 %v2345, %v2345
      %v2474 = vpack.c.bf16 %v2346, %v2346
      %v2475 = vpack.c.bf16 %v2347, %v2347
      %v2476 = vpack.c.bf16 %v2348, %v2348
      %v2477 = vpack.c.bf16 %v2349, %v2349
      %v2478 = vpack.c.bf16 %v2350, %v2350
      %v2479 = vpack.c.bf16 %v2351, %v2351
      %v2480 = vpack.c.bf16 %v2352, %v2352
      %v2481 = vpack.c.bf16 %v2353, %v2353
      %v2482 = vpack.c.bf16 %v2354, %v2354
      %v2483 = vpack.c.bf16 %v2355, %v2355
      %v2484 = vpack.c.bf16 %v2356, %v2356
      %v2485 = vpack.c.bf16 %v2357, %v2357
      %v2486 = vpack.c.bf16 %v2358, %v2358
      %v2487 = vpack.c.bf16 %v2359, %v2359
      %v2488 = vpack.c.bf16 %v2360, %v2360
      %v2489 = vpack.c.bf16 %v2361, %v2361
      %v2490 = vpack.c.bf16 %v2362, %v2362
      %v2491 = vpack.c.bf16 %v2363, %v2363
      %v2492 = vpack.c.bf16 %v2364, %v2364
      %v2493 = vpack.c.bf16 %v2365, %v2365
      %v2494 = vpack.c.bf16 %v2366, %v2366
      %v2495 = vpack.c.bf16 %v2367, %v2367
      %v2496 = vpack.c.bf16 %v2368, %v2368
      %v2497 = vpack.c.bf16 %v2369, %v2369
      %v2498 = vpack.c.bf16 %v2370, %v2370
      %v2499 = vpack.c.bf16 %v2371, %v2371
      %v2500 = vpack.c.bf16 %v2372, %v2372
      %v2501 = vpack.c.bf16 %v2373, %v2373
      %v2502 = vpack.c.bf16 %v2374, %v2374
      %v2503 = vpack.c.bf16 %v2375, %v2375
      %v2504 = vpack.c.bf16 %v2376, %v2376
      %v2505 = vpack.c.bf16 %v2377, %v2377
      %v2506 = vpack.c.bf16 %v2378, %v2378
      %v2507 = vpack.c.bf16 %v2379, %v2379
      %v2508 = vpack.c.bf16 %v2380, %v2380
      %v2509 = vpack.c.bf16 %v2381, %v2381
      %v2510 = vpack.c.bf16 %v2382, %v2382
      %v2511 = vpack.c.bf16 %v2383, %v2383
      %v2512 = vpack.c.bf16 %v2384, %v2384
      %v2513 = vpack.c.bf16 %v2385, %v2385
      %v2514 = vpack.c.bf16 %v2386, %v2386
      %v2515 = vpack.c.bf16 %v2387, %v2387
      %v2516 = vpack.c.bf16 %v2388, %v2388
      %v2517 = vpack.c.bf16 %v2389, %v2389
      %v2518 = vpack.c.bf16 %v2390, %v2390
      %v2519 = vpack.c.bf16 %v2391, %v2391
      %v2520 = vpack.c.bf16 %v2392, %v2392
      %v2521 = vpack.c.bf16 %v2393, %v2393
      %v2522 = vpack.c.bf16 %v2394, %v2394
      %v2523 = vpack.c.bf16 %v2395, %v2395
      %v2524 = vpack.c.bf16 %v2396, %v2396
      %v2525 = vpack.c.bf16 %v2397, %v2397
      %v2526 = vpack.c.bf16 %v2398, %v2398
      %v2527 = vpack.c.bf16 %v2399, %v2399
      %v2528 = vpack.c.bf16 %v2400, %v2400
      %v2529 = vpack.c.bf16 %v2401, %v2401
      %v2530 = vpack.c.bf16 %v2402, %v2402
      %v2531 = vpack.c.bf16 %v2403, %v2403
      %v2532 = vpack.c.bf16 %v2404, %v2404
      %v2533 = vpack.c.bf16 %v2405, %v2405
      %v2534 = vpack.c.bf16 %v2406, %v2406
      %v2535 = vpack.c.bf16 %v2407, %v2407
      %v2536 = vpack.c.bf16 %v2408, %v2408
      %v2537 = vpack.c.bf16 %v2409, %v2409
      %v2538 = vpack.c.bf16 %v2410, %v2410
      %v2539 = vpack.c.bf16 %v2411, %v2411
      %v2540 = vpack.c.bf16 %v2412, %v2412
      %v2541 = vpack.c.bf16 %v2413, %v2413
      %v2542 = vpack.c.bf16 %v2414, %v2414
      %v2543 = vpack.c.bf16 %v2415, %v2415
      %v2672 = vunpack.c.l.b16 %v2416
      %v2673 = vunpack.c.l.b16 %v2417
      %v2674 = vunpack.c.l.b16 %v2418
      %v2675 = vunpack.c.l.b16 %v2419
      %v2676 = vunpack.c.l.b16 %v2420
      %v2677 = vunpack.c.l.b16 %v2421
      %v2678 = vunpack.c.l.b16 %v2422
      %v2679 = vunpack.c.l.b16 %v2423
      %v2680 = vunpack.c.l.b16 %v2424
      %v2681 = vunpack.c.l.b16 %v2425
      %v2682 = vunpack.c.l.b16 %v2426
      %v2683 = vunpack.c.l.b16 %v2427
      %v2684 = vunpack.c.l.b16 %v2428
      %v2685 = vunpack.c.l.b16 %v2429
      %v2686 = vunpack.c.l.b16 %v2430
      %v2687 = vunpack.c.l.b16 %v2431
      %v2688 = vunpack.c.l.b16 %v2432
      %v2689 = vunpack.c.l.b16 %v2433
      %v2690 = vunpack.c.l.b16 %v2434
      %v2691 = vunpack.c.l.b16 %v2435
      %v2692 = vunpack.c.l.b16 %v2436
      %v2693 = vunpack.c.l.b16 %v2437
      %v2694 = vunpack.c.l.b16 %v2438
      %v2695 = vunpack.c.l.b16 %v2439
      %v2696 = vunpack.c.l.b16 %v2440
      %v2697 = vunpack.c.l.b16 %v2441
      %v2698 = vunpack.c.l.b16 %v2442
      %v2699 = vunpack.c.l.b16 %v2443
      %v2700 = vunpack.c.l.b16 %v2444
      %v2701 = vunpack.c.l.b16 %v2445
      %v2702 = vunpack.c.l.b16 %v2446
      %v2703 = vunpack.c.l.b16 %v2447
      %v2704 = vunpack.c.l.b16 %v2448
      %v2705 = vunpack.c.l.b16 %v2449
      %v2706 = vunpack.c.l.b16 %v2450
      %v2707 = vunpack.c.l.b16 %v2451
      %v2708 = vunpack.c.l.b16 %v2452
      %v2709 = vunpack.c.l.b16 %v2453
      %v2710 = vunpack.c.l.b16 %v2454
      %v2711 = vunpack.c.l.b16 %v2455
      %v2712 = vunpack.c.l.b16 %v2456
      %v2713 = vunpack.c.l.b16 %v2457
      %v2714 = vunpack.c.l.b16 %v2458
      %v2715 = vunpack.c.l.b16 %v2459
      %v2716 = vunpack.c.l.b16 %v2460
      %v2717 = vunpack.c.l.b16 %v2461
      %v2718 = vunpack.c.l.b16 %v2462
      %v2719 = vunpack.c.l.b16 %v2463
      %v2720 = vunpack.c.l.b16 %v2464
      %v2721 = vunpack.c.l.b16 %v2465
      %v2722 = vunpack.c.l.b16 %v2466
      %v2723 = vunpack.c.l.b16 %v2467
      %v2724 = vunpack.c.l.b16 %v2468
      %v2725 = vunpack.c.l.b16 %v2469
      %v2726 = vunpack.c.l.b16 %v2470
      %v2727 = vunpack.c.l.b16 %v2471
      %v2728 = vunpack.c.l.b16 %v2472
      %v2729 = vunpack.c.l.b16 %v2473
      %v2730 = vunpack.c.l.b16 %v2474
      %v2731 = vunpack.c.l.b16 %v2475
      %v2732 = vunpack.c.l.b16 %v2476
      %v2733 = vunpack.c.l.b16 %v2477
      %v2734 = vunpack.c.l.b16 %v2478
      %v2735 = vunpack.c.l.b16 %v2479
      %v2736 = vunpack.c.l.b16 %v2480
      %v2737 = vunpack.c.l.b16 %v2481
      %v2738 = vunpack.c.l.b16 %v2482
      %v2739 = vunpack.c.l.b16 %v2483
      %v2740 = vunpack.c.l.b16 %v2484
      %v2741 = vunpack.c.l.b16 %v2485
      %v2742 = vunpack.c.l.b16 %v2486
      %v2743 = vunpack.c.l.b16 %v2487
      %v2744 = vunpack.c.l.b16 %v2488
      %v2745 = vunpack.c.l.b16 %v2489
      %v2746 = vunpack.c.l.b16 %v2490
      %v2747 = vunpack.c.l.b16 %v2491
      %v2748 = vunpack.c.l.b16 %v2492
      %v2749 = vunpack.c.l.b16 %v2493
      %v2750 = vunpack.c.l.b16 %v2494
      %v2751 = vunpack.c.l.b16 %v2495
      %v2752 = vunpack.c.l.b16 %v2496
      %v2753 = vunpack.c.l.b16 %v2497
      %v2754 = vunpack.c.l.b16 %v2498
      %v2755 = vunpack.c.l.b16 %v2499
      %v2756 = vunpack.c.l.b16 %v2500
      %v2757 = vunpack.c.l.b16 %v2501
      %v2758 = vunpack.c.l.b16 %v2502
      %v2759 = vunpack.c.l.b16 %v2503
      %v2760 = vunpack.c.l.b16 %v2504
      %v2761 = vunpack.c.l.b16 %v2505
      %v2762 = vunpack.c.l.b16 %v2506
      %v2763 = vunpack.c.l.b16 %v2507
      %v2764 = vunpack.c.l.b16 %v2508
      %v2765 = vunpack.c.l.b16 %v2509
      %v2766 = vunpack.c.l.b16 %v2510
      %v2767 = vunpack.c.l.b16 %v2511
      %v2768 = vunpack.c.l.b16 %v2512
      %v2769 = vunpack.c.l.b16 %v2513
      %v2770 = vunpack.c.l.b16 %v2514
      %v2771 = vunpack.c.l.b16 %v2515
      %v2772 = vunpack.c.l.b16 %v2516
      %v2773 = vunpack.c.l.b16 %v2517
      %v2774 = vunpack.c.l.b16 %v2518
      %v2775 = vunpack.c.l.b16 %v2519
      %v2776 = vunpack.c.l.b16 %v2520
      %v2777 = vunpack.c.l.b16 %v2521
      %v2778 = vunpack.c.l.b16 %v2522
      %v2779 = vunpack.c.l.b16 %v2523
      %v2780 = vunpack.c.l.b16 %v2524
      %v2781 = vunpack.c.l.b16 %v2525
      %v2782 = vunpack.c.l.b16 %v2526
      %v2783 = vunpack.c.l.b16 %v2527
      %v2784 = vunpack.c.l.b16 %v2528
      %v2785 = vunpack.c.l.b16 %v2529
      %v2786 = vunpack.c.l.b16 %v2530
      %v2787 = vunpack.c.l.b16 %v2531
      %v2788 = vunpack.c.l.b16 %v2532
      %v2789 = vunpack.c.l.b16 %v2533
      %v2790 = vunpack.c.l.b16 %v2534
      %v2791 = vunpack.c.l.b16 %v2535
      %v2792 = vunpack.c.l.b16 %v2536
      %v2793 = vunpack.c.l.b16 %v2537
      %v2794 = vunpack.c.l.b16 %v2538
      %v2795 = vunpack.c.l.b16 %v2539
      %v2796 = vunpack.c.l.b16 %v2540
      %v2797 = vunpack.c.l.b16 %v2541
      %v2798 = vunpack.c.l.b16 %v2542
      %v2799 = vunpack.c.l.b16 %v2543
      %v2800 = vpack.c.b16 %v2672, %v2672
      %v2801 = vpack.c.b16 %v2673, %v2673
      %v2802 = vpack.c.b16 %v2674, %v2674
      %v2803 = vpack.c.b16 %v2675, %v2675
      %v2804 = vpack.c.b16 %v2676, %v2676
      %v2805 = vpack.c.b16 %v2677, %v2677
      %v2806 = vpack.c.b16 %v2678, %v2678
      %v2807 = vpack.c.b16 %v2679, %v2679
      %v2808 = vpack.c.b16 %v2680, %v2680
      %v2809 = vpack.c.b16 %v2681, %v2681
      %v2810 = vpack.c.b16 %v2682, %v2682
      %v2811 = vpack.c.b16 %v2683, %v2683
      %v2812 = vpack.c.b16 %v2684, %v2684
      %v2813 = vpack.c.b16 %v2685, %v2685
      %v2814 = vpack.c.b16 %v2686, %v2686
      %v2815 = vpack.c.b16 %v2687, %v2687
      %v2816 = vpack.c.b16 %v2688, %v2688
      %v2817 = vpack.c.b16 %v2689, %v2689
      %v2818 = vpack.c.b16 %v2690, %v2690
      %v2819 = vpack.c.b16 %v2691, %v2691
      %v2820 = vpack.c.b16 %v2692, %v2692
      %v2821 = vpack.c.b16 %v2693, %v2693
      %v2822 = vpack.c.b16 %v2694, %v2694
      %v2823 = vpack.c.b16 %v2695, %v2695
      %v2824 = vpack.c.b16 %v2696, %v2696
      %v2825 = vpack.c.b16 %v2697, %v2697
      %v2826 = vpack.c.b16 %v2698, %v2698
      %v2827 = vpack.c.b16 %v2699, %v2699
      %v2828 = vpack.c.b16 %v2700, %v2700
      %v2829 = vpack.c.b16 %v2701, %v2701
      %v2830 = vpack.c.b16 %v2702, %v2702
      %v2831 = vpack.c.b16 %v2703, %v2703
      %v2832 = vpack.c.b16 %v2704, %v2704
      %v2833 = vpack.c.b16 %v2705, %v2705
      %v2834 = vpack.c.b16 %v2706, %v2706
      %v2835 = vpack.c.b16 %v2707, %v2707
      %v2836 = vpack.c.b16 %v2708, %v2708
      %v2837 = vpack.c.b16 %v2709, %v2709
      %v2838 = vpack.c.b16 %v2710, %v2710
      %v2839 = vpack.c.b16 %v2711, %v2711
      %v2840 = vpack.c.b16 %v2712, %v2712
      %v2841 = vpack.c.b16 %v2713, %v2713
      %v2842 = vpack.c.b16 %v2714, %v2714
      %v2843 = vpack.c.b16 %v2715, %v2715
      %v2844 = vpack.c.b16 %v2716, %v2716
      %v2845 = vpack.c.b16 %v2717, %v2717
      %v2846 = vpack.c.b16 %v2718, %v2718
      %v2847 = vpack.c.b16 %v2719, %v2719
      %v2848 = vpack.c.b16 %v2720, %v2720
      %v2849 = vpack.c.b16 %v2721, %v2721
      %v2850 = vpack.c.b16 %v2722, %v2722
      %v2851 = vpack.c.b16 %v2723, %v2723
      %v2852 = vpack.c.b16 %v2724, %v2724
      %v2853 = vpack.c.b16 %v2725, %v2725
      %v2854 = vpack.c.b16 %v2726, %v2726
      %v2855 = vpack.c.b16 %v2727, %v2727
      %v2856 = vpack.c.b16 %v2728, %v2728
      %v2857 = vpack.c.b16 %v2729, %v2729
      %v2858 = vpack.c.b16 %v2730, %v2730
      %v2859 = vpack.c.b16 %v2731, %v2731
      %v2860 = vpack.c.b16 %v2732, %v2732
      %v2861 = vpack.c.b16 %v2733, %v2733
      %v2862 = vpack.c.b16 %v2734, %v2734
      %v2863 = vpack.c.b16 %v2735, %v2735
      %v2864 = vpack.c.b16 %v2736, %v2736
      %v2865 = vpack.c.b16 %v2737, %v2737
      %v2866 = vpack.c.b16 %v2738, %v2738
      %v2867 = vpack.c.b16 %v2739, %v2739
      %v2868 = vpack.c.b16 %v2740, %v2740
      %v2869 = vpack.c.b16 %v2741, %v2741
      %v2870 = vpack.c.b16 %v2742, %v2742
      %v2871 = vpack.c.b16 %v2743, %v2743
      %v2872 = vpack.c.b16 %v2744, %v2744
      %v2873 = vpack.c.b16 %v2745, %v2745
      %v2874 = vpack.c.b16 %v2746, %v2746
      %v2875 = vpack.c.b16 %v2747, %v2747
      %v2876 = vpack.c.b16 %v2748, %v2748
      %v2877 = vpack.c.b16 %v2749, %v2749
      %v2878 = vpack.c.b16 %v2750, %v2750
      %v2879 = vpack.c.b16 %v2751, %v2751
      %v2880 = vpack.c.b16 %v2752, %v2752
      %v2881 = vpack.c.b16 %v2753, %v2753
      %v2882 = vpack.c.b16 %v2754, %v2754
      %v2883 = vpack.c.b16 %v2755, %v2755
      %v2884 = vpack.c.b16 %v2756, %v2756
      %v2885 = vpack.c.b16 %v2757, %v2757
      %v2886 = vpack.c.b16 %v2758, %v2758
      %v2887 = vpack.c.b16 %v2759, %v2759
      %v2888 = vpack.c.b16 %v2760, %v2760
      %v2889 = vpack.c.b16 %v2761, %v2761
      %v2890 = vpack.c.b16 %v2762, %v2762
      %v2891 = vpack.c.b16 %v2763, %v2763
      %v2892 = vpack.c.b16 %v2764, %v2764
      %v2893 = vpack.c.b16 %v2765, %v2765
      %v2894 = vpack.c.b16 %v2766, %v2766
      %v2895 = vpack.c.b16 %v2767, %v2767
      %v2896 = vpack.c.b16 %v2768, %v2768
      %v2897 = vpack.c.b16 %v2769, %v2769
      %v2898 = vpack.c.b16 %v2770, %v2770
      %v2899 = vpack.c.b16 %v2771, %v2771
      %v2900 = vpack.c.b16 %v2772, %v2772
      %v2901 = vpack.c.b16 %v2773, %v2773
      %v2902 = vpack.c.b16 %v2774, %v2774
      %v2903 = vpack.c.b16 %v2775, %v2775
      %v2904 = vpack.c.b16 %v2776, %v2776
      %v2905 = vpack.c.b16 %v2777, %v2777
      %v2906 = vpack.c.b16 %v2778, %v2778
      %v2907 = vpack.c.b16 %v2779, %v2779
      %v2908 = vpack.c.b16 %v2780, %v2780
      %v2909 = vpack.c.b16 %v2781, %v2781
      %v2910 = vpack.c.b16 %v2782, %v2782
      %v2911 = vpack.c.b16 %v2783, %v2783
      %v2912 = vpack.c.b16 %v2784, %v2784
      %v2913 = vpack.c.b16 %v2785, %v2785
      %v2914 = vpack.c.b16 %v2786, %v2786
      %v2915 = vpack.c.b16 %v2787, %v2787
      %v2916 = vpack.c.b16 %v2788, %v2788
      %v2917 = vpack.c.b16 %v2789, %v2789
      %v2918 = vpack.c.b16 %v2790, %v2790
      %v2919 = vpack.c.b16 %v2791, %v2791
      %v2920 = vpack.c.b16 %v2792, %v2792
      %v2921 = vpack.c.b16 %v2793, %v2793
      %v2922 = vpack.c.b16 %v2794, %v2794
      %v2923 = vpack.c.b16 %v2795, %v2795
      %v2924 = vpack.c.b16 %v2796, %v2796
      %v2925 = vpack.c.b16 %v2797, %v2797
      %v2926 = vpack.c.b16 %v2798, %v2798
      %v2927 = vpack.c.b16 %v2799, %v2799
      %v2928 = vunpack.c.l.b16 %v2800
      %v2929 = vunpack.c.l.b16 %v2801
      %v2930 = vunpack.c.l.b16 %v2802
      %v2931 = vunpack.c.l.b16 %v2803
      %v2932 = vunpack.c.l.b16 %v2804
      %v2933 = vunpack.c.l.b16 %v2805
      %v2934 = vunpack.c.l.b16 %v2806
      %v2935 = vunpack.c.l.b16 %v2807
      %v2936 = vunpack.c.l.b16 %v2808
      %v2937 = vunpack.c.l.b16 %v2809
      %v2938 = vunpack.c.l.b16 %v2810
      %v2939 = vunpack.c.l.b16 %v2811
      %v2940 = vunpack.c.l.b16 %v2812
      %v2941 = vunpack.c.l.b16 %v2813
      %v2942 = vunpack.c.l.b16 %v2814
      %v2943 = vunpack.c.l.b16 %v2815
      %v2944 = vunpack.c.l.b16 %v2816
      %v2945 = vunpack.c.l.b16 %v2817
      %v2946 = vunpack.c.l.b16 %v2818
      %v2947 = vunpack.c.l.b16 %v2819
      %v2948 = vunpack.c.l.b16 %v2820
      %v2949 = vunpack.c.l.b16 %v2821
      %v2950 = vunpack.c.l.b16 %v2822
      %v2951 = vunpack.c.l.b16 %v2823
      %v2952 = vunpack.c.l.b16 %v2824
      %v2953 = vunpack.c.l.b16 %v2825
      %v2954 = vunpack.c.l.b16 %v2826
      %v2955 = vunpack.c.l.b16 %v2827
      %v2956 = vunpack.c.l.b16 %v2828
      %v2957 = vunpack.c.l.b16 %v2829
      %v2958 = vunpack.c.l.b16 %v2830
      %v2959 = vunpack.c.l.b16 %v2831
      %v2960 = vunpack.c.l.b16 %v2832
      %v2961 = vunpack.c.l.b16 %v2833
      %v2962 = vunpack.c.l.b16 %v2834
      %v2963 = vunpack.c.l.b16 %v2835
      %v2964 = vunpack.c.l.b16 %v2836
      %v2965 = vunpack.c.l.b16 %v2837
      %v2966 = vunpack.c.l.b16 %v2838
      %v2967 = vunpack.c.l.b16 %v2839
      %v2968 = vunpack.c.l.b16 %v2840
      %v2969 = vunpack.c.l.b16 %v2841
      %v2970 = vunpack.c.l.b16 %v2842
      %v2971 = vunpack.c.l.b16 %v2843
      %v2972 = vunpack.c.l.b16 %v2844
      %v2973 = vunpack.c.l.b16 %v2845
      %v2974 = vunpack.c.l.b16 %v2846
      %v2975 = vunpack.c.l.b16 %v2847
      %v2976 = vunpack.c.l.b16 %v2848
      %v2977 = vunpack.c.l.b16 %v2849
      %v2978 = vunpack.c.l.b16 %v2850
      %v2979 = vunpack.c.l.b16 %v2851
      %v2980 = vunpack.c.l.b16 %v2852
      %v2981 = vunpack.c.l.b16 %v2853
      %v2982 = vunpack.c.l.b16 %v2854
      %v2983 = vunpack.c.l.b16 %v2855
      %v2984 = vunpack.c.l.b16 %v2856
      %v2985 = vunpack.c.l.b16 %v2857
      %v2986 = vunpack.c.l.b16 %v2858
      %v2987 = vunpack.c.l.b16 %v2859
      %v2988 = vunpack.c.l.b16 %v2860
      %v2989 = vunpack.c.l.b16 %v2861
      %v2990 = vunpack.c.l.b16 %v2862
      %v2991 = vunpack.c.l.b16 %v2863
      %v2992 = vunpack.c.l.b16 %v2864
      %v2993 = vunpack.c.l.b16 %v2865
      %v2994 = vunpack.c.l.b16 %v2866
      %v2995 = vunpack.c.l.b16 %v2867
      %v2996 = vunpack.c.l.b16 %v2868
      %v2997 = vunpack.c.l.b16 %v2869
      %v2998 = vunpack.c.l.b16 %v2870
      %v2999 = vunpack.c.l.b16 %v2871
      %v3000 = vunpack.c.l.b16 %v2872
      %v3001 = vunpack.c.l.b16 %v2873
      %v3002 = vunpack.c.l.b16 %v2874
      %v3003 = vunpack.c.l.b16 %v2875
      %v3004 = vunpack.c.l.b16 %v2876
      %v3005 = vunpack.c.l.b16 %v2877
      %v3006 = vunpack.c.l.b16 %v2878
      %v3007 = vunpack.c.l.b16 %v2879
      %v3008 = vunpack.c.l.b16 %v2880
      %v3009 = vunpack.c.l.b16 %v2881
      %v3010 = vunpack.c.l.b16 %v2882
      %v3011 = vunpack.c.l.b16 %v2883
      %v3012 = vunpack.c.l.b16 %v2884
      %v3013 = vunpack.c.l.b16 %v2885
      %v3014 = vunpack.c.l.b16 %v2886
      %v3015 = vunpack.c.l.b16 %v2887
      %v3016 = vunpack.c.l.b16 %v2888
      %v3017 = vunpack.c.l.b16 %v2889
      %v3018 = vunpack.c.l.b16 %v2890
      %v3019 = vunpack.c.l.b16 %v2891
      %v3020 = vunpack.c.l.b16 %v2892
      %v3021 = vunpack.c.l.b16 %v2893
      %v3022 = vunpack.c.l.b16 %v2894
      %v3023 = vunpack.c.l.b16 %v2895
      %v3024 = vunpack.c.l.b16 %v2896
      %v3025 = vunpack.c.l.b16 %v2897
      %v3026 = vunpack.c.l.b16 %v2898
      %v3027 = vunpack.c.l.b16 %v2899
      %v3028 = vunpack.c.l.b16 %v2900
      %v3029 = vunpack.c.l.b16 %v2901
      %v3030 = vunpack.c.l.b16 %v2902
      %v3031 = vunpack.c.l.b16 %v2903
      %v3032 = vunpack.c.l.b16 %v2904
      %v3033 = vunpack.c.l.b16 %v2905
      %v3034 = vunpack.c.l.b16 %v2906
      %v3035 = vunpack.c.l.b16 %v2907
      %v3036 = vunpack.c.l.b16 %v2908
      %v3037 = vunpack.c.l.b16 %v2909
      %v3038 = vunpack.c.l.b16 %v2910
      %v3039 = vunpack.c.l.b16 %v2911
      %v3040 = vunpack.c.l.b16 %v2912
      %v3041 = vunpack.c.l.b16 %v2913
      %v3042 = vunpack.c.l.b16 %v2914
      %v3043 = vunpack.c.l.b16 %v2915
      %v3044 = vunpack.c.l.b16 %v2916
      %v3045 = vunpack.c.l.b16 %v2917
      %v3046 = vunpack.c.l.b16 %v2918
      %v3047 = vunpack.c.l.b16 %v2919
      %v3048 = vunpack.c.l.b16 %v2920
      %v3049 = vunpack.c.l.b16 %v2921
      %v3050 = vunpack.c.l.b16 %v2922
      %v3051 = vunpack.c.l.b16 %v2923
      %v3052 = vunpack.c.l.b16 %v2924
      %v3053 = vunpack.c.l.b16 %v2925
      %v3054 = vunpack.c.l.b16 %v2926
      %v3055 = vunpack.c.l.b16 %v2927
      %v3056 = vrot.slane %v2929, 7
      %vm3057 = vcmask 1041409
      %v3058 = vsel %vm3057, %v3056, %v2928
      %v3059 = vrot.slane %v2930, 6
      %vm3060 = vcmask 1042434
      %v3061 = vsel %vm3060, %v3059, %v3058
      %v3062 = vrot.slane %v2931, 5
      %vm3063 = vcmask 1043459
      %v3064 = vsel %vm3063, %v3062, %v3061
      %v3065 = vrot.slane %v2932, 4
      %vm3066 = vcmask 1044484
      %v3067 = vsel %vm3066, %v3065, %v3064
      %v3068 = vrot.slane %v2933, 3
      %vm3069 = vcmask 1045509
      %v3070 = vsel %vm3069, %v3068, %v3067
      %v3071 = vrot.slane %v2934, 2
      %vm3072 = vcmask 1046534
      %v3073 = vsel %vm3072, %v3071, %v3070
      %v3074 = vrot.slane %v2935, 1
      %vm3075 = vcmask 1047559
      %v3076 = vsel %vm3075, %v3074, %v3073
      %v3077 = vrot.slane %v2937, 7
      %v3078 = vsel %vm3057, %v3077, %v2936
      %v3079 = vrot.slane %v2938, 6
      %v3080 = vsel %vm3060, %v3079, %v3078
      %v3081 = vrot.slane %v2939, 5
      %v3082 = vsel %vm3063, %v3081, %v3080
      %v3083 = vrot.slane %v2940, 4
      %v3084 = vsel %vm3066, %v3083, %v3082
      %v3085 = vrot.slane %v2941, 3
      %v3086 = vsel %vm3069, %v3085, %v3084
      %v3087 = vrot.slane %v2942, 2
      %v3088 = vsel %vm3072, %v3087, %v3086
      %v3089 = vrot.slane %v2943, 1
      %v3090 = vsel %vm3075, %v3089, %v3088
      %v3091 = vrot.slane %v2945, 7
      %v3092 = vsel %vm3057, %v3091, %v2944
      %v3093 = vrot.slane %v2946, 6
      %v3094 = vsel %vm3060, %v3093, %v3092
      %v3095 = vrot.slane %v2947, 5
      %v3096 = vsel %vm3063, %v3095, %v3094
      %v3097 = vrot.slane %v2948, 4
      %v3098 = vsel %vm3066, %v3097, %v3096
      %v3099 = vrot.slane %v2949, 3
      %v3100 = vsel %vm3069, %v3099, %v3098
      %v3101 = vrot.slane %v2950, 2
      %v3102 = vsel %vm3072, %v3101, %v3100
      %v3103 = vrot.slane %v2951, 1
      %v3104 = vsel %vm3075, %v3103, %v3102
      %v3105 = vrot.slane %v2953, 7
      %v3106 = vsel %vm3057, %v3105, %v2952
      %v3107 = vrot.slane %v2954, 6
      %v3108 = vsel %vm3060, %v3107, %v3106
      %v3109 = vrot.slane %v2955, 5
      %v3110 = vsel %vm3063, %v3109, %v3108
      %v3111 = vrot.slane %v2956, 4
      %v3112 = vsel %vm3066, %v3111, %v3110
      %v3113 = vrot.slane %v2957, 3
      %v3114 = vsel %vm3069, %v3113, %v3112
      %v3115 = vrot.slane %v2958, 2
      %v3116 = vsel %vm3072, %v3115, %v3114
      %v3117 = vrot.slane %v2959, 1
      %v3118 = vsel %vm3075, %v3117, %v3116
      %v3119 = vrot.slane %v2961, 7
      %v3120 = vsel %vm3057, %v3119, %v2960
      %v3121 = vrot.slane %v2962, 6
      %v3122 = vsel %vm3060, %v3121, %v3120
      %v3123 = vrot.slane %v2963, 5
      %v3124 = vsel %vm3063, %v3123, %v3122
      %v3125 = vrot.slane %v2964, 4
      %v3126 = vsel %vm3066, %v3125, %v3124
      %v3127 = vrot.slane %v2965, 3
      %v3128 = vsel %vm3069, %v3127, %v3126
      %v3129 = vrot.slane %v2966, 2
      %v3130 = vsel %vm3072, %v3129, %v3128
      %v3131 = vrot.slane %v2967, 1
      %v3132 = vsel %vm3075, %v3131, %v3130
      %v3133 = vrot.slane %v2969, 7
      %v3134 = vsel %vm3057, %v3133, %v2968
      %v3135 = vrot.slane %v2970, 6
      %v3136 = vsel %vm3060, %v3135, %v3134
      %v3137 = vrot.slane %v2971, 5
      %v3138 = vsel %vm3063, %v3137, %v3136
      %v3139 = vrot.slane %v2972, 4
      %v3140 = vsel %vm3066, %v3139, %v3138
      %v3141 = vrot.slane %v2973, 3
      %v3142 = vsel %vm3069, %v3141, %v3140
      %v3143 = vrot.slane %v2974, 2
      %v3144 = vsel %vm3072, %v3143, %v3142
      %v3145 = vrot.slane %v2975, 1
      %v3146 = vsel %vm3075, %v3145, %v3144
      %v3147 = vrot.slane %v2977, 7
      %v3148 = vsel %vm3057, %v3147, %v2976
      %v3149 = vrot.slane %v2978, 6
      %v3150 = vsel %vm3060, %v3149, %v3148
      %v3151 = vrot.slane %v2979, 5
      %v3152 = vsel %vm3063, %v3151, %v3150
      %v3153 = vrot.slane %v2980, 4
      %v3154 = vsel %vm3066, %v3153, %v3152
      %v3155 = vrot.slane %v2981, 3
      %v3156 = vsel %vm3069, %v3155, %v3154
      %v3157 = vrot.slane %v2982, 2
      %v3158 = vsel %vm3072, %v3157, %v3156
      %v3159 = vrot.slane %v2983, 1
      %v3160 = vsel %vm3075, %v3159, %v3158
      %v3161 = vrot.slane %v2985, 7
      %v3162 = vsel %vm3057, %v3161, %v2984
      %v3163 = vrot.slane %v2986, 6
      %v3164 = vsel %vm3060, %v3163, %v3162
      %v3165 = vrot.slane %v2987, 5
      %v3166 = vsel %vm3063, %v3165, %v3164
      %v3167 = vrot.slane %v2988, 4
      %v3168 = vsel %vm3066, %v3167, %v3166
      %v3169 = vrot.slane %v2989, 3
      %v3170 = vsel %vm3069, %v3169, %v3168
      %v3171 = vrot.slane %v2990, 2
      %v3172 = vsel %vm3072, %v3171, %v3170
      %v3173 = vrot.slane %v2991, 1
      %v3174 = vsel %vm3075, %v3173, %v3172
      %v3175 = vrot.slane %v2993, 7
      %v3176 = vsel %vm3057, %v3175, %v2992
      %v3177 = vrot.slane %v2994, 6
      %v3178 = vsel %vm3060, %v3177, %v3176
      %v3179 = vrot.slane %v2995, 5
      %v3180 = vsel %vm3063, %v3179, %v3178
      %v3181 = vrot.slane %v2996, 4
      %v3182 = vsel %vm3066, %v3181, %v3180
      %v3183 = vrot.slane %v2997, 3
      %v3184 = vsel %vm3069, %v3183, %v3182
      %v3185 = vrot.slane %v2998, 2
      %v3186 = vsel %vm3072, %v3185, %v3184
      %v3187 = vrot.slane %v2999, 1
      %v3188 = vsel %vm3075, %v3187, %v3186
      %v3189 = vrot.slane %v3001, 7
      %v3190 = vsel %vm3057, %v3189, %v3000
      %v3191 = vrot.slane %v3002, 6
      %v3192 = vsel %vm3060, %v3191, %v3190
      %v3193 = vrot.slane %v3003, 5
      %v3194 = vsel %vm3063, %v3193, %v3192
      %v3195 = vrot.slane %v3004, 4
      %v3196 = vsel %vm3066, %v3195, %v3194
      %v3197 = vrot.slane %v3005, 3
      %v3198 = vsel %vm3069, %v3197, %v3196
      %v3199 = vrot.slane %v3006, 2
      %v3200 = vsel %vm3072, %v3199, %v3198
      %v3201 = vrot.slane %v3007, 1
      %v3202 = vsel %vm3075, %v3201, %v3200
      %v3203 = vrot.slane %v3009, 7
      %v3204 = vsel %vm3057, %v3203, %v3008
      %v3205 = vrot.slane %v3010, 6
      %v3206 = vsel %vm3060, %v3205, %v3204
      %v3207 = vrot.slane %v3011, 5
      %v3208 = vsel %vm3063, %v3207, %v3206
      %v3209 = vrot.slane %v3012, 4
      %v3210 = vsel %vm3066, %v3209, %v3208
      %v3211 = vrot.slane %v3013, 3
      %v3212 = vsel %vm3069, %v3211, %v3210
      %v3213 = vrot.slane %v3014, 2
      %v3214 = vsel %vm3072, %v3213, %v3212
      %v3215 = vrot.slane %v3015, 1
      %v3216 = vsel %vm3075, %v3215, %v3214
      %v3217 = vrot.slane %v3017, 7
      %v3218 = vsel %vm3057, %v3217, %v3016
      %v3219 = vrot.slane %v3018, 6
      %v3220 = vsel %vm3060, %v3219, %v3218
      %v3221 = vrot.slane %v3019, 5
      %v3222 = vsel %vm3063, %v3221, %v3220
      %v3223 = vrot.slane %v3020, 4
      %v3224 = vsel %vm3066, %v3223, %v3222
      %v3225 = vrot.slane %v3021, 3
      %v3226 = vsel %vm3069, %v3225, %v3224
      %v3227 = vrot.slane %v3022, 2
      %v3228 = vsel %vm3072, %v3227, %v3226
      %v3229 = vrot.slane %v3023, 1
      %v3230 = vsel %vm3075, %v3229, %v3228
      %v3231 = vrot.slane %v3025, 7
      %v3232 = vsel %vm3057, %v3231, %v3024
      %v3233 = vrot.slane %v3026, 6
      %v3234 = vsel %vm3060, %v3233, %v3232
      %v3235 = vrot.slane %v3027, 5
      %v3236 = vsel %vm3063, %v3235, %v3234
      %v3237 = vrot.slane %v3028, 4
      %v3238 = vsel %vm3066, %v3237, %v3236
      %v3239 = vrot.slane %v3029, 3
      %v3240 = vsel %vm3069, %v3239, %v3238
      %v3241 = vrot.slane %v3030, 2
      %v3242 = vsel %vm3072, %v3241, %v3240
      %v3243 = vrot.slane %v3031, 1
      %v3244 = vsel %vm3075, %v3243, %v3242
      %v3245 = vrot.slane %v3033, 7
      %v3246 = vsel %vm3057, %v3245, %v3032
      %v3247 = vrot.slane %v3034, 6
      %v3248 = vsel %vm3060, %v3247, %v3246
      %v3249 = vrot.slane %v3035, 5
      %v3250 = vsel %vm3063, %v3249, %v3248
      %v3251 = vrot.slane %v3036, 4
      %v3252 = vsel %vm3066, %v3251, %v3250
      %v3253 = vrot.slane %v3037, 3
      %v3254 = vsel %vm3069, %v3253, %v3252
      %v3255 = vrot.slane %v3038, 2
      %v3256 = vsel %vm3072, %v3255, %v3254
      %v3257 = vrot.slane %v3039, 1
      %v3258 = vsel %vm3075, %v3257, %v3256
      %v3259 = vrot.slane %v3041, 7
      %v3260 = vsel %vm3057, %v3259, %v3040
      %v3261 = vrot.slane %v3042, 6
      %v3262 = vsel %vm3060, %v3261, %v3260
      %v3263 = vrot.slane %v3043, 5
      %v3264 = vsel %vm3063, %v3263, %v3262
      %v3265 = vrot.slane %v3044, 4
      %v3266 = vsel %vm3066, %v3265, %v3264
      %v3267 = vrot.slane %v3045, 3
      %v3268 = vsel %vm3069, %v3267, %v3266
      %v3269 = vrot.slane %v3046, 2
      %v3270 = vsel %vm3072, %v3269, %v3268
      %v3271 = vrot.slane %v3047, 1
      %v3272 = vsel %vm3075, %v3271, %v3270
      %v3273 = vrot.slane %v3049, 7
      %v3274 = vsel %vm3057, %v3273, %v3048
      %v3275 = vrot.slane %v3050, 6
      %v3276 = vsel %vm3060, %v3275, %v3274
      %v3277 = vrot.slane %v3051, 5
      %v3278 = vsel %vm3063, %v3277, %v3276
      %v3279 = vrot.slane %v3052, 4
      %v3280 = vsel %vm3066, %v3279, %v3278
      %v3281 = vrot.slane %v3053, 3
      %v3282 = vsel %vm3069, %v3281, %v3280
      %v3283 = vrot.slane %v3054, 2
      %v3284 = vsel %vm3072, %v3283, %v3282
      %v3285 = vrot.slane %v3055, 1
      %v3286 = vsel %vm3075, %v3285, %v3284
      %v3287 = vpack.c.b16 %v3076, %v3076
      %v3288 = vpack.c.b16 %v3090, %v3090
      %v3289 = vpack.c.b16 %v3104, %v3104
      %v3290 = vpack.c.b16 %v3118, %v3118
      %v3291 = vpack.c.b16 %v3132, %v3132
      %v3292 = vpack.c.b16 %v3146, %v3146
      %v3293 = vpack.c.b16 %v3160, %v3160
      %v3294 = vpack.c.b16 %v3174, %v3174
      %v3295 = vpack.c.b16 %v3188, %v3188
      %v3296 = vpack.c.b16 %v3202, %v3202
      %v3297 = vpack.c.b16 %v3216, %v3216
      %v3298 = vpack.c.b16 %v3230, %v3230
      %v3299 = vpack.c.b16 %v3244, %v3244
      %v3300 = vpack.c.b16 %v3258, %v3258
      %v3301 = vpack.c.b16 %v3272, %v3272
      %v3302 = vpack.c.b16 %v3286, %v3286
      %3319 = vst [vmem:[%s172] sm:$0xf] %v3287
      %3320 = vst [vmem:[%s172 + $0x4] sm:$0xf] %v3288
      %3321 = vst [vmem:[%s172 + $0x8] sm:$0xf] %v3289
      %3322 = vst [vmem:[%s172 + $0xc] sm:$0xf] %v3290
      %3323 = vst [vmem:[%s172 + $0x10] sm:$0xf] %v3291
      %3324 = vst [vmem:[%s172 + $0x14] sm:$0xf] %v3292
      %3325 = vst [vmem:[%s172 + $0x18] sm:$0xf] %v3293
      %3326 = vst [vmem:[%s172 + $0x1c] sm:$0xf] %v3294
      %3327 = vst [vmem:[%s172 + $0x20] sm:$0xf] %v3295
      %3328 = vst [vmem:[%s172 + $0x24] sm:$0xf] %v3296
      %3329 = vst [vmem:[%s172 + $0x28] sm:$0xf] %v3297
      %3330 = vst [vmem:[%s172 + $0x2c] sm:$0xf] %v3298
      %3331 = vst [vmem:[%s172 + $0x30] sm:$0xf] %v3299
      %3332 = vst [vmem:[%s172 + $0x34] sm:$0xf] %v3300
      %3333 = vst [vmem:[%s172 + $0x38] sm:$0xf] %v3301
      %3334 = vst [vmem:[%s172 + $0x3c] sm:$0xf] %v3302
      %s3335 = smul.u32 16, %s14
      %p3336 = scmp.lt.s32.totalorder %s3335, 63
      %s3337 = scalar_select %p3336, %s3335, 63
      %s3338 = smul.addr %s3337, 4
      %s3339 = scalar_lea.vmem %s3, %s3338
      // Predicated region
      $region33: #{cnn_forward.1} parent=31 // pred_check
        %p3340 = pneg %p100
      $region34: #{cnn_forward.1} parent=31 // pred_check_branch
        %3342 = sbr.rel (%p3340) target = $region36
      $region35: #{cnn_forward.1} parent=31 // pred_region
        %s3343 = smul.u32 16, %s14
      $region36: #{cnn_forward.1} parent=31 // pred_fallthru
        _
    $region32: #{cnn_forward.1} parent=5 // pred_fallthru
      _
    %p3344 = scmp.le.s32.totalorder 2, %s9
    // Predicated region
    $region37: #{cnn_forward.1} parent=5 // pred_check
      %p3345 = pneg %p3344
    $region38: #{cnn_forward.1} parent=5 // pred_check_branch
      %3347 = sbr.rel (%p3345) target = $region40
    $region39: #{cnn_forward.1} parent=5 // pred_region
      %s3348 = ssub.s32 %s9, 2
      // Predicated region
      $region41: #{cnn_forward.1} parent=39 // pred_check
        %p3349 = pneg %p106
      $region42: #{cnn_forward.1} parent=39 // pred_check_branch
        %3351 = sbr.rel (%p3349) target = $region44
      $region43: #{cnn_forward.1} parent=39 // pred_region
        %s3352 = smul.u32 16, %s15
        %p3353 = scmp.lt.s32.totalorder %s3352, 63
        %s3354 = scalar_select %p3353, %s3352, 63
        %s3355 = smul.addr %s3354, 4
        %s3356 = scalar_lea.vmem %s3, %s3355
      $region44: #{cnn_forward.1} parent=39 // pred_fallthru
        _
    $region40: #{cnn_forward.1} parent=5 // pred_fallthru
      _
  $region6: #{cnn_forward.1} parent=0 // loop_footer
    %s13 = sadd.s32 1, %s9
  $region7: #{cnn_forward.1} parent=0 // loop_footer_branch
    %8 = sbr.rel target = $region3
  $region8: #{cnn_forward.1} parent=0 // loop_exit
    _

</llo_original>
